<compile_context>
chip_gen: v6e
topology: v6e:2x2x1
jax: 0.10.0
libtpu: 0.0.40
codegen_flags: <defaults>
</compile_context>

<pallas_src>
import functools
import math

import jax
import jax.numpy as jnp
from jax import lax
from jax.experimental import pallas as pl
from jax.experimental.pallas import tpu as pltpu


def _srl16(v):
    """Logical right-shift by 16 on int32 (arithmetic shift + mask)."""
    return jnp.bitwise_and(jnp.right_shift(v, 16), 0xFFFF)


def _mix(v):
    """32-bit integer finalizer (Wang hash); int32 wrap == uint32 math."""
    v = (_srl16(v) ^ v) * 0x45D9F3B
    v = (_srl16(v) ^ v) * 0x45D9F3B
    v = _srl16(v) ^ v
    return v


def _gaussian_noise_kernel(seed_ref, x_ref, o_ref, *, mean, std, tile_rows, lanes):
    half = tile_rows // 2          # static python int (tile_rows is even)
    pid = pl.program_id(0)

    # Whitened per-call key from the SMEM-prefetched seed (decorrelates
    # adjacent integer seeds).
    key = _mix(seed_ref[0] ^ 0x5851F42D)

    # Global element index for each entry of the FIRST half of this tile.
    # Each index produces a pair of normals: cos half -> rows [0, half),
    # sin half -> rows [half, tile_rows).
    row = lax.broadcasted_iota(jnp.int32, (half, lanes), 0)
    col = lax.broadcasted_iota(jnp.int32, (half, lanes), 1)
    idx = pid * (tile_rows * lanes) + row * lanes + col

    base = idx * 2 + key
    b1 = _mix(base)
    b2 = _mix(base + 1)

    # 23-bit uniforms; u1 is strictly in (0, 1) so log() is safe.
    inv23 = jnp.float32(1.0 / (1 << 23))
    u1 = (jnp.bitwise_and(b1, 0x7FFFFF).astype(jnp.float32) + 0.5) * inv23
    u2 = jnp.bitwise_and(b2, 0x7FFFFF).astype(jnp.float32) * inv23

    # Box-Muller: two independent normals per uniform pair; std folded in.
    r = jnp.float32(std) * jnp.sqrt(-2.0 * jnp.log(u1))
    theta = jnp.float32(2.0 * math.pi) * u2
    n1 = r * jnp.cos(theta)
    n2 = r * jnp.sin(theta)
    if mean != 0.0:                 # static: skipped for the default mean=0
        n1 = n1 + jnp.float32(mean)
        n2 = n2 + jnp.float32(mean)

    x1 = x_ref[0:half, :].astype(jnp.float32)
    x2 = x_ref[half:tile_rows, :].astype(jnp.float32)
    o_ref[0:half, :] = (x1 + n1).astype(o_ref.dtype)
    o_ref[half:tile_rows, :] = (x2 + n2).astype(o_ref.dtype)


def _choose_tiling(total, itemsize, target_block_bytes=2 * 1024 * 1024):
    """Lane-dense 2D layout + block size (~2 MiB, generation-safe for v7x VMEM)."""
    lanes = 128
    for cand in (1024, 512, 256, 128):
        if total % cand == 0:
            lanes = cand
            break
    rows = -(-total // lanes)
    max_tile_rows = max(8, target_block_bytes // (lanes * itemsize))
    if rows <= max_tile_rows:
        tile_rows = rows + (rows % 2)          # single block; even for pairing
    else:
        tile_rows = (max_tile_rows // 8) * 8   # sublane-dense multiple of 8
    padded_rows = -(-rows // tile_rows) * tile_rows
    return lanes, tile_rows, padded_rows


def gaussian_noise_forward(x, seed, *, mean=0.0, std=0.15, module_batch_size=None):
    """y = x + fresh N(mean, std) noise (same semantics as the PyTorch module).

    `module_batch_size` mirrors the module's fixed noise-buffer batch size;
    since noise is freshly sampled i.i.d. each call, using only the first
    x.shape[0] rows is distributionally identical to slicing a bigger buffer.
    """
    orig_shape = x.shape
    if module_batch_size is not None:
        assert orig_shape[0] <= module_batch_size, "x batch exceeds module batch_size"

    total = int(x.size)
    itemsize = jnp.dtype(x.dtype).itemsize
    lanes, tile_rows, padded_rows = _choose_tiling(total, itemsize)
    padded_total = padded_rows * lanes

    x_flat = x.reshape(-1)
    if padded_total != total:
        x_flat = jnp.concatenate(
            [x_flat, jnp.zeros((padded_total - total,), x.dtype)])
    x2 = x_flat.reshape(padded_rows, lanes)

    seed_arr = jnp.asarray([seed], dtype=jnp.int32)
    kernel = functools.partial(
        _gaussian_noise_kernel,
        mean=float(mean), std=float(std), tile_rows=tile_rows, lanes=lanes)

    out2 = pl.pallas_call(
        kernel,
        out_shape=jax.ShapeDtypeStruct((padded_rows, lanes), x.dtype),
        grid_spec=pltpu.PrefetchScalarGridSpec(
            num_scalar_prefetch=1,
            grid=(padded_rows // tile_rows,),
            in_specs=[pl.BlockSpec((tile_rows, lanes), lambda i, seed_ref: (i, 0))],
            out_specs=pl.BlockSpec((tile_rows, lanes), lambda i, seed_ref: (i, 0)),
        ),
        compiler_params=pltpu.CompilerParams(
            dimension_semantics=("parallel",),
        ),
        # TODO(synk): if in-place update of x is acceptable in the surrounding
        # model, add input_output_aliases to drop the extra HBM output buffer.
    )(seed_arr, x2)

    out_flat = out2.reshape(-1)
    if padded_total != total:
        out_flat = out_flat[:total]
    return out_flat.reshape(orig_shape)


if __name__ == "__main__":
    # Small shapes consistent with the module's (batch, C, H, W) convention.
    B, C, H, W = 2, 4, 16, 16
    mean, std = 0.0, 0.15

    key = jax.random.PRNGKey(0)
    x = jax.random.normal(key, (B, C, H, W), dtype=jnp.float32)

    y = gaussian_noise_forward(x, seed=1234, mean=mean, std=std,
                               module_batch_size=B)
    y = jax.block_until_ready(y)

    # Shape/dtype preserved; residual noise has roughly the requested stats.
    assert y.shape == x.shape and y.dtype == x.dtype
    resid = (y - x).astype(jnp.float32)
    r_mean = float(jnp.mean(resid))
    r_std = float(jnp.std(resid))
    assert abs(r_mean - mean) < 0.05, r_mean
    assert abs(r_std - std) < 0.05, r_std

    # Counter-based RNG: same seed reproduces, different seed differs.
    y_same = jax.block_until_ready(
        gaussian_noise_forward(x, seed=1234, mean=mean, std=std))
    y_diff = jax.block_until_ready(
        gaussian_noise_forward(x, seed=4321, mean=mean, std=std))
    assert bool(jnp.all(y_same == y)), "same seed must reproduce"
    assert not bool(jnp.all(y_diff == y)), "different seed must differ"

    print("KERNEL_OK")
</pallas_src>

<mosaic_0001>
module attributes {stable_mosaic.version = 11 : i64} {
  func.func @_gaussian_noise_kernel(%arg0: i32, %arg1: memref<1xi32, #tpu.memory_space<smem>>, %arg2: memref<2x1024xf32, #tpu.memory_space<vmem>>, %arg3: memref<2x1024xf32, #tpu.memory_space<vmem>>) attributes {dimension_semantics = [#tpu.dimension_semantics<parallel>], iteration_bounds = array<i64: 1>, scalar_prefetch = 1 : i64, scratch_operands = 0 : i64, tpu.core_type = #tpu.core_type<tc>, window_params = [{transform_indices = @transform_0, window_bounds = array<i64: 2, 1024>}, {transform_indices = @transform_1, window_bounds = array<i64: 2, 1024>}]} {
    %c0 = arith.constant 0 : index
    %0 = memref.load %arg1[%c0] : memref<1xi32, #tpu.memory_space<smem>>
    %c1481765933_i32 = arith.constant 1481765933 : i32
    %1 = arith.xori %0, %c1481765933_i32 : i32
    %c16_i32 = arith.constant 16 : i32
    %2 = arith.shrsi %1, %c16_i32 : i32
    %c65535_i32 = arith.constant 65535 : i32
    %3 = arith.andi %2, %c65535_i32 : i32
    %4 = arith.xori %3, %1 : i32
    %c73244475_i32 = arith.constant 73244475 : i32
    %5 = arith.muli %4, %c73244475_i32 : i32
    %c16_i32_0 = arith.constant 16 : i32
    %6 = arith.shrsi %5, %c16_i32_0 : i32
    %c65535_i32_1 = arith.constant 65535 : i32
    %7 = arith.andi %6, %c65535_i32_1 : i32
    %8 = arith.xori %7, %5 : i32
    %c73244475_i32_2 = arith.constant 73244475 : i32
    %9 = arith.muli %8, %c73244475_i32_2 : i32
    %c16_i32_3 = arith.constant 16 : i32
    %10 = arith.shrsi %9, %c16_i32_3 : i32
    %c65535_i32_4 = arith.constant 65535 : i32
    %11 = arith.andi %10, %c65535_i32_4 : i32
    %12 = arith.xori %11, %9 : i32
    %13 = tpu.iota {dimensions = array<i32: 0>} : vector<1x1024xi32>
    %14 = tpu.iota {dimensions = array<i32: 1>} : vector<1x1024xi32>
    %c2048_i32 = arith.constant 2048 : i32
    %15 = arith.muli %arg0, %c2048_i32 : i32
    %c1024_i32 = arith.constant 1024 : i32
    %16 = vector.broadcast %c1024_i32 : i32 to vector<1x1024xi32>
    %17 = arith.muli %13, %16 : vector<1x1024xi32>
    %18 = vector.broadcast %15 : i32 to vector<1x1024xi32>
    %19 = arith.addi %18, %17 : vector<1x1024xi32>
    %20 = arith.addi %19, %14 : vector<1x1024xi32>
    %c2_i32 = arith.constant 2 : i32
    %21 = vector.broadcast %c2_i32 : i32 to vector<1x1024xi32>
    %22 = arith.muli %20, %21 : vector<1x1024xi32>
    %23 = vector.broadcast %12 : i32 to vector<1x1024xi32>
    %24 = arith.addi %22, %23 : vector<1x1024xi32>
    %c16_i32_5 = arith.constant 16 : i32
    %25 = vector.broadcast %c16_i32_5 : i32 to vector<1x1024xi32>
    %26 = arith.shrsi %24, %25 : vector<1x1024xi32>
    %c65535_i32_6 = arith.constant 65535 : i32
    %27 = vector.broadcast %c65535_i32_6 : i32 to vector<1x1024xi32>
    %28 = arith.andi %26, %27 : vector<1x1024xi32>
    %29 = arith.xori %28, %24 : vector<1x1024xi32>
    %c73244475_i32_7 = arith.constant 73244475 : i32
    %30 = vector.broadcast %c73244475_i32_7 : i32 to vector<1x1024xi32>
    %31 = arith.muli %29, %30 : vector<1x1024xi32>
    %c16_i32_8 = arith.constant 16 : i32
    %32 = vector.broadcast %c16_i32_8 : i32 to vector<1x1024xi32>
    %33 = arith.shrsi %31, %32 : vector<1x1024xi32>
    %c65535_i32_9 = arith.constant 65535 : i32
    %34 = vector.broadcast %c65535_i32_9 : i32 to vector<1x1024xi32>
    %35 = arith.andi %33, %34 : vector<1x1024xi32>
    %36 = arith.xori %35, %31 : vector<1x1024xi32>
    %c73244475_i32_10 = arith.constant 73244475 : i32
    %37 = vector.broadcast %c73244475_i32_10 : i32 to vector<1x1024xi32>
    %38 = arith.muli %36, %37 : vector<1x1024xi32>
    %c16_i32_11 = arith.constant 16 : i32
    %39 = vector.broadcast %c16_i32_11 : i32 to vector<1x1024xi32>
    %40 = arith.shrsi %38, %39 : vector<1x1024xi32>
    %c65535_i32_12 = arith.constant 65535 : i32
    %41 = vector.broadcast %c65535_i32_12 : i32 to vector<1x1024xi32>
    %42 = arith.andi %40, %41 : vector<1x1024xi32>
    %43 = arith.xori %42, %38 : vector<1x1024xi32>
    %c1_i32 = arith.constant 1 : i32
    %44 = vector.broadcast %c1_i32 : i32 to vector<1x1024xi32>
    %45 = arith.addi %24, %44 : vector<1x1024xi32>
    %c16_i32_13 = arith.constant 16 : i32
    %46 = vector.broadcast %c16_i32_13 : i32 to vector<1x1024xi32>
    %47 = arith.shrsi %45, %46 : vector<1x1024xi32>
    %c65535_i32_14 = arith.constant 65535 : i32
    %48 = vector.broadcast %c65535_i32_14 : i32 to vector<1x1024xi32>
    %49 = arith.andi %47, %48 : vector<1x1024xi32>
    %50 = arith.xori %49, %45 : vector<1x1024xi32>
    %c73244475_i32_15 = arith.constant 73244475 : i32
    %51 = vector.broadcast %c73244475_i32_15 : i32 to vector<1x1024xi32>
    %52 = arith.muli %50, %51 : vector<1x1024xi32>
    %c16_i32_16 = arith.constant 16 : i32
    %53 = vector.broadcast %c16_i32_16 : i32 to vector<1x1024xi32>
    %54 = arith.shrsi %52, %53 : vector<1x1024xi32>
    %c65535_i32_17 = arith.constant 65535 : i32
    %55 = vector.broadcast %c65535_i32_17 : i32 to vector<1x1024xi32>
    %56 = arith.andi %54, %55 : vector<1x1024xi32>
    %57 = arith.xori %56, %52 : vector<1x1024xi32>
    %c73244475_i32_18 = arith.constant 73244475 : i32
    %58 = vector.broadcast %c73244475_i32_18 : i32 to vector<1x1024xi32>
    %59 = arith.muli %57, %58 : vector<1x1024xi32>
    %c16_i32_19 = arith.constant 16 : i32
    %60 = vector.broadcast %c16_i32_19 : i32 to vector<1x1024xi32>
    %61 = arith.shrsi %59, %60 : vector<1x1024xi32>
    %c65535_i32_20 = arith.constant 65535 : i32
    %62 = vector.broadcast %c65535_i32_20 : i32 to vector<1x1024xi32>
    %63 = arith.andi %61, %62 : vector<1x1024xi32>
    %64 = arith.xori %63, %59 : vector<1x1024xi32>
    %c8388607_i32 = arith.constant 8388607 : i32
    %65 = vector.broadcast %c8388607_i32 : i32 to vector<1x1024xi32>
    %66 = arith.andi %43, %65 : vector<1x1024xi32>
    %67 = arith.sitofp %66 : vector<1x1024xi32> to vector<1x1024xf32>
    %cst = arith.constant 5.000000e-01 : f32
    %68 = vector.broadcast %cst : f32 to vector<1x1024xf32>
    %69 = arith.addf %67, %68 : vector<1x1024xf32>
    %cst_21 = arith.constant 1.1920929E-7 : f32
    %70 = vector.broadcast %cst_21 : f32 to vector<1x1024xf32>
    %71 = arith.mulf %69, %70 : vector<1x1024xf32>
    %c8388607_i32_22 = arith.constant 8388607 : i32
    %72 = vector.broadcast %c8388607_i32_22 : i32 to vector<1x1024xi32>
    %73 = arith.andi %64, %72 : vector<1x1024xi32>
    %74 = arith.sitofp %73 : vector<1x1024xi32> to vector<1x1024xf32>
    %cst_23 = arith.constant 1.1920929E-7 : f32
    %75 = vector.broadcast %cst_23 : f32 to vector<1x1024xf32>
    %76 = arith.mulf %74, %75 : vector<1x1024xf32>
    %77 = math.log %71 : vector<1x1024xf32>
    %cst_24 = arith.constant -2.000000e+00 : f32
    %78 = vector.broadcast %cst_24 : f32 to vector<1x1024xf32>
    %79 = arith.mulf %78, %77 : vector<1x1024xf32>
    %80 = math.sqrt %79 : vector<1x1024xf32>
    %cst_25 = arith.constant 1.500000e-01 : f32
    %81 = vector.broadcast %cst_25 : f32 to vector<1x1024xf32>
    %82 = arith.mulf %81, %80 : vector<1x1024xf32>
    %cst_26 = arith.constant 6.28318548 : f32
    %83 = vector.broadcast %cst_26 : f32 to vector<1x1024xf32>
    %84 = arith.mulf %83, %76 : vector<1x1024xf32>
    %85 = math.cos %84 : vector<1x1024xf32>
    %86 = arith.mulf %82, %85 : vector<1x1024xf32>
    %87 = math.sin %84 : vector<1x1024xf32>
    %88 = arith.mulf %82, %87 : vector<1x1024xf32>
    %c0_27 = arith.constant 0 : index
    %c0_28 = arith.constant 0 : index
    %89 = vector.load %arg2[%c0_27, %c0_28] : memref<2x1024xf32, #tpu.memory_space<vmem>>, vector<1x1024xf32>
    %c1 = arith.constant 1 : index
    %c0_29 = arith.constant 0 : index
    %90 = vector.load %arg2[%c1, %c0_29] : memref<2x1024xf32, #tpu.memory_space<vmem>>, vector<1x1024xf32>
    %91 = arith.addf %89, %86 : vector<1x1024xf32>
    %c0_30 = arith.constant 0 : index
    %c0_31 = arith.constant 0 : index
    %92 = vector.load %arg3[%c0_30, %c0_31] : memref<2x1024xf32, #tpu.memory_space<vmem>>, vector<1x1024xf32>
    tpu.vector_store %arg3[%c0_30, %c0_31], %91 {strides = array<i32>} : memref<2x1024xf32, #tpu.memory_space<vmem>>, vector<1x1024xf32>,
    %93 = arith.addf %90, %88 : vector<1x1024xf32>
    %c1_32 = arith.constant 1 : index
    %c0_33 = arith.constant 0 : index
    %94 = vector.load %arg3[%c1_32, %c0_33] : memref<2x1024xf32, #tpu.memory_space<vmem>>, vector<1x1024xf32>
    tpu.vector_store %arg3[%c1_32, %c0_33], %93 {strides = array<i32>} : memref<2x1024xf32, #tpu.memory_space<vmem>>, vector<1x1024xf32>,
    return
  }
  func.func @transform_0(%arg0: i32, %arg1: memref<1xi32, #tpu.memory_space<smem>>) -> (i32, i32) {
    %c0_i32 = arith.constant 0 : i32
    %c0_i32_0 = arith.constant 0 : i32
    return %arg0, %c0_i32 : i32, i32
  }
  func.func @transform_1(%arg0: i32, %arg1: memref<1xi32, #tpu.memory_space<smem>>) -> (i32, i32) {
    %c0_i32 = arith.constant 0 : i32
    %c0_i32_0 = arith.constant 0 : i32
    return %arg0, %c0_i32 : i32, i32
  }
}

</mosaic_0001>

<llo_original>
// kernel: tpu_custom_call.1
$region0: #{tpu_custom_call.1}
  #allocation0 [shape = 'u32[]', space=smem, size = 0x4, offset = 0x4, fixed_abs, tag = 'smem constant byte address 0x4 - core index']
  #allocation1 [shape = 'u32[144,128]{1,0:T(1,128)}', space=vmem, size = 0x12000, scoped, tag = 'internal scratch']
  #allocation2 [shape = 's32[1]{0}', space=sflag, size = 0x4, scoped, tag = 'scoped memory for tpu_custom_call.1']
  #allocation3 [shape = 's32[1]{0:T(128)S(6)}', space=smem, size = 0x200, scoped, tag = 'prefetched SMEM operand 0']
  %s0 = inlined_call_operand.<no memory space> [shape: s32[1], index: 0, kind: input, shape index: {}]
  %s1 = inlined_call_operand.hbm [shape: f32[2,1024], index: 1, kind: input, shape index: {}]
  %s2 = inlined_call_operand.hbm [shape: f32[2,1024], index: 2, kind: output, shape index: {}]
  %s3 = sld [smem:[#allocation0]]
  $region18: #{tpu_custom_call.1} parent=0
    _
  %s5 = ssub.s32 1, %s3
  %s6 = scalar_select 0, %s5, %s3
  %7 = sst [smem:[#allocation3]] %s0
  $region1: #{tpu_custom_call.1} parent=0
    #allocation4 [shape = 'u8[8192]{0}', space=vmem, size = 0x2000, scoped, tag = 'input window, operand 1, single buffered']
    #allocation5 [shape = 's32[1]{0}', space=sflag, size = 0x4, scoped, tag = 'scoped memory for tpu_custom_call.1']
    #allocation6 [shape = 's32[1]{0}', space=sflag, size = 0x4, scoped, tag = 'scoped memory for tpu_custom_call.1']
    #allocation7 [shape = 'u8[8192]{0}', space=vmem, size = 0x2000, scoped, tag = 'output window, operand 0, single buffered']
    %8 = vsyncpa [#allocation5], 0
    %9 = vsyncpa [#allocation6], 0
    // Predicated region
    $region2: #{tpu_custom_call.1} parent=1 // pred_check
      _
    $region3: #{tpu_custom_call.1} parent=1 // pred_check_branch
      %11 = sbr.rel (0) target = $region5
    $region4: #{tpu_custom_call.1} parent=1 // pred_region
      %s13 = ssub.s32 256, 256
      %14 = vsyncadd [#allocation5], %s13
      %s16 = sshll.u32 [#allocation4], 4
      %s17 = int_to_ptr.vmem [resolvable:$true] %s16
      %19 = dma.hbm_to_vmem [thread:$0]  %s1, 256, %s17, [#allocation5]
    $region5: #{tpu_custom_call.1} parent=1 // pred_fallthru
      _
    // Predicated region
    $region6: #{tpu_custom_call.1} parent=1 // pred_check
      _
    $region7: #{tpu_custom_call.1} parent=1 // pred_check_branch
      %21 = sbr.rel (0) target = $region9
    $region8: #{tpu_custom_call.1} parent=1 // pred_region
      %22 = dma.done [#allocation5], 256
    $region9: #{tpu_custom_call.1} parent=1 // pred_fallthru
      _
    %s23 = sld [smem:[#allocation3]]
    %s24 = sxor.u32 %s23, 1481765933
    %s25 = sshra.s32 %s24, 16
    %s26 = sand.u32 %s25, 65535
    %s27 = sxor.u32 %s26, %s24
    %s28 = smul.u32 %s27, 73244475
    %s29 = sshra.s32 %s28, 16
    %s30 = sand.u32 %s29, 65535
    %s31 = sxor.u32 %s30, %s28
    %s32 = smul.u32 %s31, 73244475
    %s33 = sshra.s32 %s32, 16
    %s34 = sand.u32 %s33, 65535
    %s35 = sxor.u32 %s34, %s32
    %v36 = vlaneseq
    %v37 = vshrl.u32 %v36, 7
    %v38 = vlaneseq
    %v39 = vand.u32 %v38, 127
    %v40 = vadd.s32 %v39, 128
    %v41 = vadd.s32 %v39, 256
    %v42 = vadd.s32 %v39, 384
    %v43 = vadd.s32 %v39, 512
    %v44 = vadd.s32 %v39, 640
    %v45 = vadd.s32 %v39, 768
    %v46 = vadd.s32 %v39, 896
    %s47 = smul.u32 0, 2048
    %v48 = vmul.u32 %v37, 1024
    %v49 = vstv %s47
    %v50 = vadd.s32 %v49, %v48
    %v51 = vadd.s32 %v50, %v39
    %v52 = vadd.s32 %v50, %v40
    %v53 = vadd.s32 %v50, %v41
    %v54 = vadd.s32 %v50, %v42
    %v55 = vadd.s32 %v50, %v43
    %v56 = vadd.s32 %v50, %v44
    %v57 = vadd.s32 %v50, %v45
    %v58 = vadd.s32 %v50, %v46
    %v59 = vmul.u32 %v51, 2
    %v60 = vmul.u32 %v52, 2
    %v61 = vmul.u32 %v53, 2
    %v62 = vmul.u32 %v54, 2
    %v63 = vmul.u32 %v55, 2
    %v64 = vmul.u32 %v56, 2
    %v65 = vmul.u32 %v57, 2
    %v66 = vmul.u32 %v58, 2
    %v67 = vstv %s35
    %v68 = vadd.s32 %v59, %v67
    %v69 = vadd.s32 %v60, %v67
    %v70 = vadd.s32 %v61, %v67
    %v71 = vadd.s32 %v62, %v67
    %v72 = vadd.s32 %v63, %v67
    %v73 = vadd.s32 %v64, %v67
    %v74 = vadd.s32 %v65, %v67
    %v75 = vadd.s32 %v66, %v67
    %v76 = vshra.s32 %v68, 16
    %v77 = vshra.s32 %v69, 16
    %v78 = vshra.s32 %v70, 16
    %v79 = vshra.s32 %v71, 16
    %v80 = vshra.s32 %v72, 16
    %v81 = vshra.s32 %v73, 16
    %v82 = vshra.s32 %v74, 16
    %v83 = vshra.s32 %v75, 16
    %v84 = vand.u32 %v76, 65535
    %v85 = vand.u32 %v77, 65535
    %v86 = vand.u32 %v78, 65535
    %v87 = vand.u32 %v79, 65535
    %v88 = vand.u32 %v80, 65535
    %v89 = vand.u32 %v81, 65535
    %v90 = vand.u32 %v82, 65535
    %v91 = vand.u32 %v83, 65535
    %v92 = vxor.u32 %v84, %v68
    %v93 = vxor.u32 %v85, %v69
    %v94 = vxor.u32 %v86, %v70
    %v95 = vxor.u32 %v87, %v71
    %v96 = vxor.u32 %v88, %v72
    %v97 = vxor.u32 %v89, %v73
    %v98 = vxor.u32 %v90, %v74
    %v99 = vxor.u32 %v91, %v75
    %v100 = vmul.u32 %v92, 73244475
    %v101 = vmul.u32 %v93, 73244475
    %v102 = vmul.u32 %v94, 73244475
    %v103 = vmul.u32 %v95, 73244475
    %v104 = vmul.u32 %v96, 73244475
    %v105 = vmul.u32 %v97, 73244475
    %v106 = vmul.u32 %v98, 73244475
    %v107 = vmul.u32 %v99, 73244475
    %v108 = vshra.s32 %v100, 16
    %v109 = vshra.s32 %v101, 16
    %v110 = vshra.s32 %v102, 16
    %v111 = vshra.s32 %v103, 16
    %v112 = vshra.s32 %v104, 16
    %v113 = vshra.s32 %v105, 16
    %v114 = vshra.s32 %v106, 16
    %v115 = vshra.s32 %v107, 16
    %v116 = vand.u32 %v108, 65535
    %v117 = vand.u32 %v109, 65535
    %v118 = vand.u32 %v110, 65535
    %v119 = vand.u32 %v111, 65535
    %v120 = vand.u32 %v112, 65535
    %v121 = vand.u32 %v113, 65535
    %v122 = vand.u32 %v114, 65535
    %v123 = vand.u32 %v115, 65535
    %v124 = vxor.u32 %v116, %v100
    %v125 = vxor.u32 %v117, %v101
    %v126 = vxor.u32 %v118, %v102
    %v127 = vxor.u32 %v119, %v103
    %v128 = vxor.u32 %v120, %v104
    %v129 = vxor.u32 %v121, %v105
    %v130 = vxor.u32 %v122, %v106
    %v131 = vxor.u32 %v123, %v107
    %v132 = vmul.u32 %v124, 73244475
    %v133 = vmul.u32 %v125, 73244475
    %v134 = vmul.u32 %v126, 73244475
    %v135 = vmul.u32 %v127, 73244475
    %v136 = vmul.u32 %v128, 73244475
    %v137 = vmul.u32 %v129, 73244475
    %v138 = vmul.u32 %v130, 73244475
    %v139 = vmul.u32 %v131, 73244475
    %v140 = vshra.s32 %v132, 16
    %v141 = vshra.s32 %v133, 16
    %v142 = vshra.s32 %v134, 16
    %v143 = vshra.s32 %v135, 16
    %v144 = vshra.s32 %v136, 16
    %v145 = vshra.s32 %v137, 16
    %v146 = vshra.s32 %v138, 16
    %v147 = vshra.s32 %v139, 16
    %v148 = vand.u32 %v140, 65535
    %v149 = vand.u32 %v141, 65535
    %v150 = vand.u32 %v142, 65535
    %v151 = vand.u32 %v143, 65535
    %v152 = vand.u32 %v144, 65535
    %v153 = vand.u32 %v145, 65535
    %v154 = vand.u32 %v146, 65535
    %v155 = vand.u32 %v147, 65535
    %v156 = vxor.u32 %v148, %v132
    %v157 = vxor.u32 %v149, %v133
    %v158 = vxor.u32 %v150, %v134
    %v159 = vxor.u32 %v151, %v135
    %v160 = vxor.u32 %v152, %v136
    %v161 = vxor.u32 %v153, %v137
    %v162 = vxor.u32 %v154, %v138
    %v163 = vxor.u32 %v155, %v139
    %v164 = vadd.s32 %v68, 1
    %v165 = vadd.s32 %v69, 1
    %v166 = vadd.s32 %v70, 1
    %v167 = vadd.s32 %v71, 1
    %v168 = vadd.s32 %v72, 1
    %v169 = vadd.s32 %v73, 1
    %v170 = vadd.s32 %v74, 1
    %v171 = vadd.s32 %v75, 1
    %v172 = vshra.s32 %v164, 16
    %v173 = vshra.s32 %v165, 16
    %v174 = vshra.s32 %v166, 16
    %v175 = vshra.s32 %v167, 16
    %v176 = vshra.s32 %v168, 16
    %v177 = vshra.s32 %v169, 16
    %v178 = vshra.s32 %v170, 16
    %v179 = vshra.s32 %v171, 16
    %v180 = vand.u32 %v172, 65535
    %v181 = vand.u32 %v173, 65535
    %v182 = vand.u32 %v174, 65535
    %v183 = vand.u32 %v175, 65535
    %v184 = vand.u32 %v176, 65535
    %v185 = vand.u32 %v177, 65535
    %v186 = vand.u32 %v178, 65535
    %v187 = vand.u32 %v179, 65535
    %v188 = vxor.u32 %v180, %v164
    %v189 = vxor.u32 %v181, %v165
    %v190 = vxor.u32 %v182, %v166
    %v191 = vxor.u32 %v183, %v167
    %v192 = vxor.u32 %v184, %v168
    %v193 = vxor.u32 %v185, %v169
    %v194 = vxor.u32 %v186, %v170
    %v195 = vxor.u32 %v187, %v171
    %v196 = vmul.u32 %v188, 73244475
    %v197 = vmul.u32 %v189, 73244475
    %v198 = vmul.u32 %v190, 73244475
    %v199 = vmul.u32 %v191, 73244475
    %v200 = vmul.u32 %v192, 73244475
    %v201 = vmul.u32 %v193, 73244475
    %v202 = vmul.u32 %v194, 73244475
    %v203 = vmul.u32 %v195, 73244475
    %v204 = vshra.s32 %v196, 16
    %v205 = vshra.s32 %v197, 16
    %v206 = vshra.s32 %v198, 16
    %v207 = vshra.s32 %v199, 16
    %v208 = vshra.s32 %v200, 16
    %v209 = vshra.s32 %v201, 16
    %v210 = vshra.s32 %v202, 16
    %v211 = vshra.s32 %v203, 16
    %v212 = vand.u32 %v204, 65535
    %v213 = vand.u32 %v205, 65535
    %v214 = vand.u32 %v206, 65535
    %v215 = vand.u32 %v207, 65535
    %v216 = vand.u32 %v208, 65535
    %v217 = vand.u32 %v209, 65535
    %v218 = vand.u32 %v210, 65535
    %v219 = vand.u32 %v211, 65535
    %v220 = vxor.u32 %v212, %v196
    %v221 = vxor.u32 %v213, %v197
    %v222 = vxor.u32 %v214, %v198
    %v223 = vxor.u32 %v215, %v199
    %v224 = vxor.u32 %v216, %v200
    %v225 = vxor.u32 %v217, %v201
    %v226 = vxor.u32 %v218, %v202
    %v227 = vxor.u32 %v219, %v203
    %v228 = vmul.u32 %v220, 73244475
    %v229 = vmul.u32 %v221, 73244475
    %v230 = vmul.u32 %v222, 73244475
    %v231 = vmul.u32 %v223, 73244475
    %v232 = vmul.u32 %v224, 73244475
    %v233 = vmul.u32 %v225, 73244475
    %v234 = vmul.u32 %v226, 73244475
    %v235 = vmul.u32 %v227, 73244475
    %v236 = vshra.s32 %v228, 16
    %v237 = vshra.s32 %v229, 16
    %v238 = vshra.s32 %v230, 16
    %v239 = vshra.s32 %v231, 16
    %v240 = vshra.s32 %v232, 16
    %v241 = vshra.s32 %v233, 16
    %v242 = vshra.s32 %v234, 16
    %v243 = vshra.s32 %v235, 16
    %v244 = vand.u32 %v236, 65535
    %v245 = vand.u32 %v237, 65535
    %v246 = vand.u32 %v238, 65535
    %v247 = vand.u32 %v239, 65535
    %v248 = vand.u32 %v240, 65535
    %v249 = vand.u32 %v241, 65535
    %v250 = vand.u32 %v242, 65535
    %v251 = vand.u32 %v243, 65535
    %v252 = vxor.u32 %v244, %v228
    %v253 = vxor.u32 %v245, %v229
    %v254 = vxor.u32 %v246, %v230
    %v255 = vxor.u32 %v247, %v231
    %v256 = vxor.u32 %v248, %v232
    %v257 = vxor.u32 %v249, %v233
    %v258 = vxor.u32 %v250, %v234
    %v259 = vxor.u32 %v251, %v235
    %v260 = vand.u32 %v156, 8388607
    %v261 = vand.u32 %v157, 8388607
    %v262 = vand.u32 %v158, 8388607
    %v263 = vand.u32 %v159, 8388607
    %v264 = vand.u32 %v160, 8388607
    %v265 = vand.u32 %v161, 8388607
    %v266 = vand.u32 %v162, 8388607
    %v267 = vand.u32 %v163, 8388607
    %v268 = vcvt.s32.f32 %v260
    %v269 = vcvt.s32.f32 %v261
    %v270 = vcvt.s32.f32 %v262
    %v271 = vcvt.s32.f32 %v263
    %v272 = vcvt.s32.f32 %v264
    %v273 = vcvt.s32.f32 %v265
    %v274 = vcvt.s32.f32 %v266
    %v275 = vcvt.s32.f32 %v267
    %v276 = vadd.f32 %v268, 0.5
    %v277 = vadd.f32 %v269, 0.5
    %v278 = vadd.f32 %v270, 0.5
    %v279 = vadd.f32 %v271, 0.5
    %v280 = vadd.f32 %v272, 0.5
    %v281 = vadd.f32 %v273, 0.5
    %v282 = vadd.f32 %v274, 0.5
    %v283 = vadd.f32 %v275, 0.5
    %v284 = vmul.f32 %v276, 1.1920929e-07
    %v285 = vmul.f32 %v277, 1.1920929e-07
    %v286 = vmul.f32 %v278, 1.1920929e-07
    %v287 = vmul.f32 %v279, 1.1920929e-07
    %v288 = vmul.f32 %v280, 1.1920929e-07
    %v289 = vmul.f32 %v281, 1.1920929e-07
    %v290 = vmul.f32 %v282, 1.1920929e-07
    %v291 = vmul.f32 %v283, 1.1920929e-07
    %v292 = vand.u32 %v252, 8388607
    %v293 = vand.u32 %v253, 8388607
    %v294 = vand.u32 %v254, 8388607
    %v295 = vand.u32 %v255, 8388607
    %v296 = vand.u32 %v256, 8388607
    %v297 = vand.u32 %v257, 8388607
    %v298 = vand.u32 %v258, 8388607
    %v299 = vand.u32 %v259, 8388607
    %v300 = vcvt.s32.f32 %v292
    %v301 = vcvt.s32.f32 %v293
    %v302 = vcvt.s32.f32 %v294
    %v303 = vcvt.s32.f32 %v295
    %v304 = vcvt.s32.f32 %v296
    %v305 = vcvt.s32.f32 %v297
    %v306 = vcvt.s32.f32 %v298
    %v307 = vcvt.s32.f32 %v299
    %v308 = vmul.f32 %v300, 1.1920929e-07
    %v309 = vmul.f32 %v301, 1.1920929e-07
    %v310 = vmul.f32 %v302, 1.1920929e-07
    %v311 = vmul.f32 %v303, 1.1920929e-07
    %v312 = vmul.f32 %v304, 1.1920929e-07
    %v313 = vmul.f32 %v305, 1.1920929e-07
    %v314 = vmul.f32 %v306, 1.1920929e-07
    %v315 = vmul.f32 %v307, 1.1920929e-07
    %v316 = vlog2.pop %v284
    %v317 = vmul.f32 %v316, 0.6931472
    %v318 = vlog2.pop %v285
    %v319 = vmul.f32 %v318, 0.6931472
    %v320 = vlog2.pop %v286
    %v321 = vmul.f32 %v320, 0.6931472
    %v322 = vlog2.pop %v287
    %v323 = vmul.f32 %v322, 0.6931472
    %v324 = vlog2.pop %v288
    %v325 = vmul.f32 %v324, 0.6931472
    %v326 = vlog2.pop %v289
    %v327 = vmul.f32 %v326, 0.6931472
    %v328 = vlog2.pop %v290
    %v329 = vmul.f32 %v328, 0.6931472
    %v330 = vlog2.pop %v291
    %v331 = vmul.f32 %v330, 0.6931472
    %v332 = vmul.f32 %v317, -2.0
    %v333 = vmul.f32 %v319, -2.0
    %v334 = vmul.f32 %v321, -2.0
    %v335 = vmul.f32 %v323, -2.0
    %v336 = vmul.f32 %v325, -2.0
    %v337 = vmul.f32 %v327, -2.0
    %v338 = vmul.f32 %v329, -2.0
    %v339 = vmul.f32 %v331, -2.0
    %v340 = vrsqrt.pop %v332
    %v341 = vmul.f32 %v332, %v340
    %vm342 = vcmp.eq.f32.partialorder %v332, inf
    %v343 = vsel %vm342, %v332, %v341
    %vm344 = vcmp.eq.f32.partialorder %v332, 0.0
    %v345 = vand.u32 %v332, 2147483648
    %v346 = vsel %vm344, %v345, %v343
    %v347 = vrsqrt.pop %v333
    %v348 = vmul.f32 %v333, %v347
    %vm349 = vcmp.eq.f32.partialorder %v333, inf
    %v350 = vsel %vm349, %v333, %v348
    %vm351 = vcmp.eq.f32.partialorder %v333, 0.0
    %v352 = vand.u32 %v333, 2147483648
    %v353 = vsel %vm351, %v352, %v350
    %v354 = vrsqrt.pop %v334
    %v355 = vmul.f32 %v334, %v354
    %vm356 = vcmp.eq.f32.partialorder %v334, inf
    %v357 = vsel %vm356, %v334, %v355
    %vm358 = vcmp.eq.f32.partialorder %v334, 0.0
    %v359 = vand.u32 %v334, 2147483648
    %v360 = vsel %vm358, %v359, %v357
    %v361 = vrsqrt.pop %v335
    %v362 = vmul.f32 %v335, %v361
    %vm363 = vcmp.eq.f32.partialorder %v335, inf
    %v364 = vsel %vm363, %v335, %v362
    %vm365 = vcmp.eq.f32.partialorder %v335, 0.0
    %v366 = vand.u32 %v335, 2147483648
    %v367 = vsel %vm365, %v366, %v364
    %v368 = vrsqrt.pop %v336
    %v369 = vmul.f32 %v336, %v368
    %vm370 = vcmp.eq.f32.partialorder %v336, inf
    %v371 = vsel %vm370, %v336, %v369
    %vm372 = vcmp.eq.f32.partialorder %v336, 0.0
    %v373 = vand.u32 %v336, 2147483648
    %v374 = vsel %vm372, %v373, %v371
    %v375 = vrsqrt.pop %v337
    %v376 = vmul.f32 %v337, %v375
    %vm377 = vcmp.eq.f32.partialorder %v337, inf
    %v378 = vsel %vm377, %v337, %v376
    %vm379 = vcmp.eq.f32.partialorder %v337, 0.0
    %v380 = vand.u32 %v337, 2147483648
    %v381 = vsel %vm379, %v380, %v378
    %v382 = vrsqrt.pop %v338
    %v383 = vmul.f32 %v338, %v382
    %vm384 = vcmp.eq.f32.partialorder %v338, inf
    %v385 = vsel %vm384, %v338, %v383
    %vm386 = vcmp.eq.f32.partialorder %v338, 0.0
    %v387 = vand.u32 %v338, 2147483648
    %v388 = vsel %vm386, %v387, %v385
    %v389 = vrsqrt.pop %v339
    %v390 = vmul.f32 %v339, %v389
    %vm391 = vcmp.eq.f32.partialorder %v339, inf
    %v392 = vsel %vm391, %v339, %v390
    %vm393 = vcmp.eq.f32.partialorder %v339, 0.0
    %v394 = vand.u32 %v339, 2147483648
    %v395 = vsel %vm393, %v394, %v392
    %v396 = vmul.f32 %v346, 0.15
    %v397 = vmul.f32 %v353, 0.15
    %v398 = vmul.f32 %v360, 0.15
    %v399 = vmul.f32 %v367, 0.15
    %v400 = vmul.f32 %v374, 0.15
    %v401 = vmul.f32 %v381, 0.15
    %v402 = vmul.f32 %v388, 0.15
    %v403 = vmul.f32 %v395, 0.15
    %v404 = vmul.f32 %v308, 6.2831855
    %v405 = vmul.f32 %v309, 6.2831855
    %v406 = vmul.f32 %v310, 6.2831855
    %v407 = vmul.f32 %v311, 6.2831855
    %v408 = vmul.f32 %v312, 6.2831855
    %v409 = vmul.f32 %v313, 6.2831855
    %v410 = vmul.f32 %v314, 6.2831855
    %v411 = vmul.f32 %v315, 6.2831855
    %v412 = vand.u32 2147483647, %v404
    %vm413 = vcmp.le.f32.partialorder %v412, 0.7853982
    %vm414 = vcmp.lt.s32.totalorder %v404, 0
    %v415 = vand.u32 %v404, 2139095040
    %v416 = vshrl.u32 %v415, 23
    %v417 = vsub.s32 %v416, 127
    %v418 = vand.u32 2147483647, %v404
    %v419 = vand.u32 %v418, 8388607
    %v420 = vor.u32 %v419, 8388608
    %v421 = vsub.s32 0, %v420
    %v422 = vadd.s32 %v417, 1
    %vm423 = vcmp.gt.s32.totalorder %v422, 0
    %v424 = vsel %vm423, %v422, 0
    %v425 = vshrl.u32 %v424, 5
    %v426 = vand.u32 %v424, 31
    %v427 = vsub.s32 32, %v426
    %v428 = vshrl.u32 683565275, %v427
    %v429 = vshll.u32 683565275, %v426
    %v430 = vshrl.u32 2475754826, %v427
    %v431 = vor.u32 %v429, %v430
    %v432 = vshll.u32 2475754826, %v426
    %v433 = vshrl.u32 2131351028, %v427
    %v434 = vor.u32 %v432, %v433
    %v435 = vshll.u32 2131351028, %v426
    %v436 = vshrl.u32 2102212464, %v427
    %v437 = vor.u32 %v435, %v436
    %v438 = vshll.u32 2102212464, %v426
    %v439 = vshrl.u32 920167782, %v427
    %v440 = vor.u32 %v438, %v439
    %v441 = vshll.u32 920167782, %v426
    %v442 = vshrl.u32 1326507024, %v427
    %v443 = vor.u32 %v441, %v442
    %vm444 = vcmp.lt.s32.totalorder %v425, 1
    %vm445 = vcmp.lt.s32.totalorder %v425, 2
    %vm446 = vcmp.lt.s32.totalorder %v425, 3
    %vm447 = vcmp.lt.s32.totalorder %v425, 4
    %v448 = vsel %vm444, %v428, %v431
    %v449 = vsel %vm447, %v437, 2102212464
    %v450 = vsel %vm446, %v434, %v449
    %v451 = vsel %vm445, %v448, %v450
    %v452 = vsel %vm444, %v431, %v434
    %v453 = vsel %vm447, %v440, 920167782
    %v454 = vsel %vm446, %v437, %v453
    %v455 = vsel %vm445, %v452, %v454
    %v456 = vsel %vm444, %v434, %v437
    %v457 = vsel %vm447, %v443, 1326507024
    %v458 = vsel %vm446, %v440, %v457
    %v459 = vsel %vm445, %v456, %v458
    %v460 = vshll.u32 %v420, 8
    %v461 = vmul.u32.u64.compose %v460, %v459
    %v462 = vextract.low.u32 %v461
    %v463 = vextract.high.u32 %v461
    %v464 = vmul.u32.u64.compose %v460, %v455
    %v465 = vextract.low.u32 %v464
    %v466 = vextract.high.u32 %v464
    %v467 = vmul.u32 %v460, %v451
    %v468 = vadd.s32 %v463, %v465
    %vm469 = vc.u32 %v463, %v465
    %v470 = vadd.s32 %v466, 1
    %v471 = vsel %vm469, %v470, %v466
    %v472 = vadd.s32 %v467, %v471
    %v473 = vadd.s32 %v472, 536870912
    %v474 = vshrl.u32 %v473, 30
    %v475 = vshll.u32 %v474, 30
    %v476 = vsub.s32 %v472, %v475
    %vm477 = vcmp.lt.s32.totalorder %v476, 0
    %v478 = vsub.s32 0, %v476
    %v479 = vsel %vm477, %v478, %v476
    %v480 = vclz %v479
    %v481 = vsub.s32 %v480, 2
    %vm482 = vcmp.gt.s32.totalorder 0, %v481
    %v483 = vsel %vm482, 0, %v481
    %v484 = vsub.s32 32, %v483
    %v485 = vshll.u32 %v476, %v483
    %v486 = vshrl.u32 %v468, %v484
    %v487 = vor.u32 %v485, %v486
    %v488 = vsub.s32 4294967266, %v483
    %v489 = vadd.s32 %v488, 127
    %v490 = vshll.u32 %v489, 23
    %v491 = vor.u32 4788187, %v490
    %v492 = vand.u32 2147483647, %v491
    %v494 = vcvt.s32.f32 %v487
    %v495 = vmul.f32 %v494, %v492
    %v496 = vxor.u32 %v495, 2147483648
    %v497 = vsel %vm414, %v496, %v495
    %v498 = vsub.s32 4, %v474
    %v499 = vsel %vm414, %v498, %v474
    %v500 = vsel %vm413, %v404, %v497
    %v501 = vsel %vm413, 0, %v499
    %v502 = vcosq.f32.pop %v500
    %v503 = vsinq.f32.pop %v500
    %vm504 = vweird.f32 %v404
    %v505 = vand.u32 %v501, 3
    %vm506 = vcmp.lt.s32.totalorder %v505, 2
    %vm507 = vcmp.eq.s32.totalorder %v505, 0
    %v508 = vxor.u32 %v503, 2147483648
    %v509 = vsel %vm507, %v502, %v508
    %vm510 = vcmp.eq.s32.totalorder %v505, 2
    %v511 = vxor.u32 %v502, 2147483648
    %v512 = vsel %vm510, %v511, %v503
    %v513 = vsel %vm506, %v509, %v512
    %v514 = vsel %vm504, nan, %v513
    %v515 = vand.u32 2147483647, %v405
    %vm516 = vcmp.le.f32.partialorder %v515, 0.7853982
    %vm517 = vcmp.lt.s32.totalorder %v405, 0
    %v518 = vand.u32 %v405, 2139095040
    %v519 = vshrl.u32 %v518, 23
    %v520 = vsub.s32 %v519, 127
    %v521 = vand.u32 2147483647, %v405
    %v522 = vand.u32 %v521, 8388607
    %v523 = vor.u32 %v522, 8388608
    %v524 = vsub.s32 0, %v523
    %v525 = vadd.s32 %v520, 1
    %vm526 = vcmp.gt.s32.totalorder %v525, 0
    %v527 = vsel %vm526, %v525, 0
    %v528 = vshrl.u32 %v527, 5
    %v529 = vand.u32 %v527, 31
    %v530 = vsub.s32 32, %v529
    %v531 = vshrl.u32 683565275, %v530
    %v532 = vshll.u32 683565275, %v529
    %v533 = vshrl.u32 2475754826, %v530
    %v534 = vor.u32 %v532, %v533
    %v535 = vshll.u32 2475754826, %v529
    %v536 = vshrl.u32 2131351028, %v530
    %v537 = vor.u32 %v535, %v536
    %v538 = vshll.u32 2131351028, %v529
    %v539 = vshrl.u32 2102212464, %v530
    %v540 = vor.u32 %v538, %v539
    %v541 = vshll.u32 2102212464, %v529
    %v542 = vshrl.u32 920167782, %v530
    %v543 = vor.u32 %v541, %v542
    %v544 = vshll.u32 920167782, %v529
    %v545 = vshrl.u32 1326507024, %v530
    %v546 = vor.u32 %v544, %v545
    %vm547 = vcmp.lt.s32.totalorder %v528, 1
    %vm548 = vcmp.lt.s32.totalorder %v528, 2
    %vm549 = vcmp.lt.s32.totalorder %v528, 3
    %vm550 = vcmp.lt.s32.totalorder %v528, 4
    %v551 = vsel %vm547, %v531, %v534
    %v552 = vsel %vm550, %v540, 2102212464
    %v553 = vsel %vm549, %v537, %v552
    %v554 = vsel %vm548, %v551, %v553
    %v555 = vsel %vm547, %v534, %v537
    %v556 = vsel %vm550, %v543, 920167782
    %v557 = vsel %vm549, %v540, %v556
    %v558 = vsel %vm548, %v555, %v557
    %v559 = vsel %vm547, %v537, %v540
    %v560 = vsel %vm550, %v546, 1326507024
    %v561 = vsel %vm549, %v543, %v560
    %v562 = vsel %vm548, %v559, %v561
    %v563 = vshll.u32 %v523, 8
    %v564 = vmul.u32.u64.compose %v563, %v562
    %v565 = vextract.low.u32 %v564
    %v566 = vextract.high.u32 %v564
    %v567 = vmul.u32.u64.compose %v563, %v558
    %v568 = vextract.low.u32 %v567
    %v569 = vextract.high.u32 %v567
    %v570 = vmul.u32 %v563, %v554
    %v571 = vadd.s32 %v566, %v568
    %vm572 = vc.u32 %v566, %v568
    %v573 = vadd.s32 %v569, 1
    %v574 = vsel %vm572, %v573, %v569
    %v575 = vadd.s32 %v570, %v574
    %v576 = vadd.s32 %v575, 536870912
    %v577 = vshrl.u32 %v576, 30
    %v578 = vshll.u32 %v577, 30
    %v579 = vsub.s32 %v575, %v578
    %vm580 = vcmp.lt.s32.totalorder %v579, 0
    %v581 = vsub.s32 0, %v579
    %v582 = vsel %vm580, %v581, %v579
    %v583 = vclz %v582
    %v584 = vsub.s32 %v583, 2
    %vm585 = vcmp.gt.s32.totalorder 0, %v584
    %v586 = vsel %vm585, 0, %v584
    %v587 = vsub.s32 32, %v586
    %v588 = vshll.u32 %v579, %v586
    %v589 = vshrl.u32 %v571, %v587
    %v590 = vor.u32 %v588, %v589
    %v591 = vsub.s32 4294967266, %v586
    %v592 = vadd.s32 %v591, 127
    %v593 = vshll.u32 %v592, 23
    %v594 = vor.u32 4788187, %v593
    %v595 = vand.u32 2147483647, %v594
    %v597 = vcvt.s32.f32 %v590
    %v598 = vmul.f32 %v597, %v595
    %v599 = vxor.u32 %v598, 2147483648
    %v600 = vsel %vm517, %v599, %v598
    %v601 = vsub.s32 4, %v577
    %v602 = vsel %vm517, %v601, %v577
    %v603 = vsel %vm516, %v405, %v600
    %v604 = vsel %vm516, 0, %v602
    %v605 = vcosq.f32.pop %v603
    %v606 = vsinq.f32.pop %v603
    %vm607 = vweird.f32 %v405
    %v608 = vand.u32 %v604, 3
    %vm609 = vcmp.lt.s32.totalorder %v608, 2
    %vm610 = vcmp.eq.s32.totalorder %v608, 0
    %v611 = vxor.u32 %v606, 2147483648
    %v612 = vsel %vm610, %v605, %v611
    %vm613 = vcmp.eq.s32.totalorder %v608, 2
    %v614 = vxor.u32 %v605, 2147483648
    %v615 = vsel %vm613, %v614, %v606
    %v616 = vsel %vm609, %v612, %v615
    %v617 = vsel %vm607, nan, %v616
    %v618 = vand.u32 2147483647, %v406
    %vm619 = vcmp.le.f32.partialorder %v618, 0.7853982
    %vm620 = vcmp.lt.s32.totalorder %v406, 0
    %v621 = vand.u32 %v406, 2139095040
    %v622 = vshrl.u32 %v621, 23
    %v623 = vsub.s32 %v622, 127
    %v624 = vand.u32 2147483647, %v406
    %v625 = vand.u32 %v624, 8388607
    %v626 = vor.u32 %v625, 8388608
    %v627 = vsub.s32 0, %v626
    %v628 = vadd.s32 %v623, 1
    %vm629 = vcmp.gt.s32.totalorder %v628, 0
    %v630 = vsel %vm629, %v628, 0
    %v631 = vshrl.u32 %v630, 5
    %v632 = vand.u32 %v630, 31
    %v633 = vsub.s32 32, %v632
    %v634 = vshrl.u32 683565275, %v633
    %v635 = vshll.u32 683565275, %v632
    %v636 = vshrl.u32 2475754826, %v633
    %v637 = vor.u32 %v635, %v636
    %v638 = vshll.u32 2475754826, %v632
    %v639 = vshrl.u32 2131351028, %v633
    %v640 = vor.u32 %v638, %v639
    %v641 = vshll.u32 2131351028, %v632
    %v642 = vshrl.u32 2102212464, %v633
    %v643 = vor.u32 %v641, %v642
    %v644 = vshll.u32 2102212464, %v632
    %v645 = vshrl.u32 920167782, %v633
    %v646 = vor.u32 %v644, %v645
    %v647 = vshll.u32 920167782, %v632
    %v648 = vshrl.u32 1326507024, %v633
    %v649 = vor.u32 %v647, %v648
    %vm650 = vcmp.lt.s32.totalorder %v631, 1
    %vm651 = vcmp.lt.s32.totalorder %v631, 2
    %vm652 = vcmp.lt.s32.totalorder %v631, 3
    %vm653 = vcmp.lt.s32.totalorder %v631, 4
    %v654 = vsel %vm650, %v634, %v637
    %v655 = vsel %vm653, %v643, 2102212464
    %v656 = vsel %vm652, %v640, %v655
    %v657 = vsel %vm651, %v654, %v656
    %v658 = vsel %vm650, %v637, %v640
    %v659 = vsel %vm653, %v646, 920167782
    %v660 = vsel %vm652, %v643, %v659
    %v661 = vsel %vm651, %v658, %v660
    %v662 = vsel %vm650, %v640, %v643
    %v663 = vsel %vm653, %v649, 1326507024
    %v664 = vsel %vm652, %v646, %v663
    %v665 = vsel %vm651, %v662, %v664
    %v666 = vshll.u32 %v626, 8
    %v667 = vmul.u32.u64.compose %v666, %v665
    %v668 = vextract.low.u32 %v667
    %v669 = vextract.high.u32 %v667
    %v670 = vmul.u32.u64.compose %v666, %v661
    %v671 = vextract.low.u32 %v670
    %v672 = vextract.high.u32 %v670
    %v673 = vmul.u32 %v666, %v657
    %v674 = vadd.s32 %v669, %v671
    %vm675 = vc.u32 %v669, %v671
    %v676 = vadd.s32 %v672, 1
    %v677 = vsel %vm675, %v676, %v672
    %v678 = vadd.s32 %v673, %v677
    %v679 = vadd.s32 %v678, 536870912
    %v680 = vshrl.u32 %v679, 30
    %v681 = vshll.u32 %v680, 30
    %v682 = vsub.s32 %v678, %v681
    %vm683 = vcmp.lt.s32.totalorder %v682, 0
    %v684 = vsub.s32 0, %v682
    %v685 = vsel %vm683, %v684, %v682
    %v686 = vclz %v685
    %v687 = vsub.s32 %v686, 2
    %vm688 = vcmp.gt.s32.totalorder 0, %v687
    %v689 = vsel %vm688, 0, %v687
    %v690 = vsub.s32 32, %v689
    %v691 = vshll.u32 %v682, %v689
    %v692 = vshrl.u32 %v674, %v690
    %v693 = vor.u32 %v691, %v692
    %v694 = vsub.s32 4294967266, %v689
    %v695 = vadd.s32 %v694, 127
    %v696 = vshll.u32 %v695, 23
    %v697 = vor.u32 4788187, %v696
    %v698 = vand.u32 2147483647, %v697
    %v700 = vcvt.s32.f32 %v693
    %v701 = vmul.f32 %v700, %v698
    %v702 = vxor.u32 %v701, 2147483648
    %v703 = vsel %vm620, %v702, %v701
    %v704 = vsub.s32 4, %v680
    %v705 = vsel %vm620, %v704, %v680
    %v706 = vsel %vm619, %v406, %v703
    %v707 = vsel %vm619, 0, %v705
    %v708 = vcosq.f32.pop %v706
    %v709 = vsinq.f32.pop %v706
    %vm710 = vweird.f32 %v406
    %v711 = vand.u32 %v707, 3
    %vm712 = vcmp.lt.s32.totalorder %v711, 2
    %vm713 = vcmp.eq.s32.totalorder %v711, 0
    %v714 = vxor.u32 %v709, 2147483648
    %v715 = vsel %vm713, %v708, %v714
    %vm716 = vcmp.eq.s32.totalorder %v711, 2
    %v717 = vxor.u32 %v708, 2147483648
    %v718 = vsel %vm716, %v717, %v709
    %v719 = vsel %vm712, %v715, %v718
    %v720 = vsel %vm710, nan, %v719
    %v721 = vand.u32 2147483647, %v407
    %vm722 = vcmp.le.f32.partialorder %v721, 0.7853982
    %vm723 = vcmp.lt.s32.totalorder %v407, 0
    %v724 = vand.u32 %v407, 2139095040
    %v725 = vshrl.u32 %v724, 23
    %v726 = vsub.s32 %v725, 127
    %v727 = vand.u32 2147483647, %v407
    %v728 = vand.u32 %v727, 8388607
    %v729 = vor.u32 %v728, 8388608
    %v730 = vsub.s32 0, %v729
    %v731 = vadd.s32 %v726, 1
    %vm732 = vcmp.gt.s32.totalorder %v731, 0
    %v733 = vsel %vm732, %v731, 0
    %v734 = vshrl.u32 %v733, 5
    %v735 = vand.u32 %v733, 31
    %v736 = vsub.s32 32, %v735
    %v737 = vshrl.u32 683565275, %v736
    %v738 = vshll.u32 683565275, %v735
    %v739 = vshrl.u32 2475754826, %v736
    %v740 = vor.u32 %v738, %v739
    %v741 = vshll.u32 2475754826, %v735
    %v742 = vshrl.u32 2131351028, %v736
    %v743 = vor.u32 %v741, %v742
    %v744 = vshll.u32 2131351028, %v735
    %v745 = vshrl.u32 2102212464, %v736
    %v746 = vor.u32 %v744, %v745
    %v747 = vshll.u32 2102212464, %v735
    %v748 = vshrl.u32 920167782, %v736
    %v749 = vor.u32 %v747, %v748
    %v750 = vshll.u32 920167782, %v735
    %v751 = vshrl.u32 1326507024, %v736
    %v752 = vor.u32 %v750, %v751
    %vm753 = vcmp.lt.s32.totalorder %v734, 1
    %vm754 = vcmp.lt.s32.totalorder %v734, 2
    %vm755 = vcmp.lt.s32.totalorder %v734, 3
    %vm756 = vcmp.lt.s32.totalorder %v734, 4
    %v757 = vsel %vm753, %v737, %v740
    %v758 = vsel %vm756, %v746, 2102212464
    %v759 = vsel %vm755, %v743, %v758
    %v760 = vsel %vm754, %v757, %v759
    %v761 = vsel %vm753, %v740, %v743
    %v762 = vsel %vm756, %v749, 920167782
    %v763 = vsel %vm755, %v746, %v762
    %v764 = vsel %vm754, %v761, %v763
    %v765 = vsel %vm753, %v743, %v746
    %v766 = vsel %vm756, %v752, 1326507024
    %v767 = vsel %vm755, %v749, %v766
    %v768 = vsel %vm754, %v765, %v767
    %v769 = vshll.u32 %v729, 8
    %v770 = vmul.u32.u64.compose %v769, %v768
    %v771 = vextract.low.u32 %v770
    %v772 = vextract.high.u32 %v770
    %v773 = vmul.u32.u64.compose %v769, %v764
    %v774 = vextract.low.u32 %v773
    %v775 = vextract.high.u32 %v773
    %v776 = vmul.u32 %v769, %v760
    %v777 = vadd.s32 %v772, %v774
    %vm778 = vc.u32 %v772, %v774
    %v779 = vadd.s32 %v775, 1
    %v780 = vsel %vm778, %v779, %v775
    %v781 = vadd.s32 %v776, %v780
    %v782 = vadd.s32 %v781, 536870912
    %v783 = vshrl.u32 %v782, 30
    %v784 = vshll.u32 %v783, 30
    %v785 = vsub.s32 %v781, %v784
    %vm786 = vcmp.lt.s32.totalorder %v785, 0
    %v787 = vsub.s32 0, %v785
    %v788 = vsel %vm786, %v787, %v785
    %v789 = vclz %v788
    %v790 = vsub.s32 %v789, 2
    %vm791 = vcmp.gt.s32.totalorder 0, %v790
    %v792 = vsel %vm791, 0, %v790
    %v793 = vsub.s32 32, %v792
    %v794 = vshll.u32 %v785, %v792
    %v795 = vshrl.u32 %v777, %v793
    %v796 = vor.u32 %v794, %v795
    %v797 = vsub.s32 4294967266, %v792
    %v798 = vadd.s32 %v797, 127
    %v799 = vshll.u32 %v798, 23
    %v800 = vor.u32 4788187, %v799
    %v801 = vand.u32 2147483647, %v800
    %v803 = vcvt.s32.f32 %v796
    %v804 = vmul.f32 %v803, %v801
    %v805 = vxor.u32 %v804, 2147483648
    %v806 = vsel %vm723, %v805, %v804
    %v807 = vsub.s32 4, %v783
    %v808 = vsel %vm723, %v807, %v783
    %v809 = vsel %vm722, %v407, %v806
    %v810 = vsel %vm722, 0, %v808
    %v811 = vcosq.f32.pop %v809
    %v812 = vsinq.f32.pop %v809
    %vm813 = vweird.f32 %v407
    %v814 = vand.u32 %v810, 3
    %vm815 = vcmp.lt.s32.totalorder %v814, 2
    %vm816 = vcmp.eq.s32.totalorder %v814, 0
    %v817 = vxor.u32 %v812, 2147483648
    %v818 = vsel %vm816, %v811, %v817
    %vm819 = vcmp.eq.s32.totalorder %v814, 2
    %v820 = vxor.u32 %v811, 2147483648
    %v821 = vsel %vm819, %v820, %v812
    %v822 = vsel %vm815, %v818, %v821
    %v823 = vsel %vm813, nan, %v822
    %v824 = vand.u32 2147483647, %v408
    %vm825 = vcmp.le.f32.partialorder %v824, 0.7853982
    %vm826 = vcmp.lt.s32.totalorder %v408, 0
    %v827 = vand.u32 %v408, 2139095040
    %v828 = vshrl.u32 %v827, 23
    %v829 = vsub.s32 %v828, 127
    %v830 = vand.u32 2147483647, %v408
    %v831 = vand.u32 %v830, 8388607
    %v832 = vor.u32 %v831, 8388608
    %v833 = vsub.s32 0, %v832
    %v834 = vadd.s32 %v829, 1
    %vm835 = vcmp.gt.s32.totalorder %v834, 0
    %v836 = vsel %vm835, %v834, 0
    %v837 = vshrl.u32 %v836, 5
    %v838 = vand.u32 %v836, 31
    %v839 = vsub.s32 32, %v838
    %v840 = vshrl.u32 683565275, %v839
    %v841 = vshll.u32 683565275, %v838
    %v842 = vshrl.u32 2475754826, %v839
    %v843 = vor.u32 %v841, %v842
    %v844 = vshll.u32 2475754826, %v838
    %v845 = vshrl.u32 2131351028, %v839
    %v846 = vor.u32 %v844, %v845
    %v847 = vshll.u32 2131351028, %v838
    %v848 = vshrl.u32 2102212464, %v839
    %v849 = vor.u32 %v847, %v848
    %v850 = vshll.u32 2102212464, %v838
    %v851 = vshrl.u32 920167782, %v839
    %v852 = vor.u32 %v850, %v851
    %v853 = vshll.u32 920167782, %v838
    %v854 = vshrl.u32 1326507024, %v839
    %v855 = vor.u32 %v853, %v854
    %vm856 = vcmp.lt.s32.totalorder %v837, 1
    %vm857 = vcmp.lt.s32.totalorder %v837, 2
    %vm858 = vcmp.lt.s32.totalorder %v837, 3
    %vm859 = vcmp.lt.s32.totalorder %v837, 4
    %v860 = vsel %vm856, %v840, %v843
    %v861 = vsel %vm859, %v849, 2102212464
    %v862 = vsel %vm858, %v846, %v861
    %v863 = vsel %vm857, %v860, %v862
    %v864 = vsel %vm856, %v843, %v846
    %v865 = vsel %vm859, %v852, 920167782
    %v866 = vsel %vm858, %v849, %v865
    %v867 = vsel %vm857, %v864, %v866
    %v868 = vsel %vm856, %v846, %v849
    %v869 = vsel %vm859, %v855, 1326507024
    %v870 = vsel %vm858, %v852, %v869
    %v871 = vsel %vm857, %v868, %v870
    %v872 = vshll.u32 %v832, 8
    %v873 = vmul.u32.u64.compose %v872, %v871
    %v874 = vextract.low.u32 %v873
    %v875 = vextract.high.u32 %v873
    %v876 = vmul.u32.u64.compose %v872, %v867
    %v877 = vextract.low.u32 %v876
    %v878 = vextract.high.u32 %v876
    %v879 = vmul.u32 %v872, %v863
    %v880 = vadd.s32 %v875, %v877
    %vm881 = vc.u32 %v875, %v877
    %v882 = vadd.s32 %v878, 1
    %v883 = vsel %vm881, %v882, %v878
    %v884 = vadd.s32 %v879, %v883
    %v885 = vadd.s32 %v884, 536870912
    %v886 = vshrl.u32 %v885, 30
    %v887 = vshll.u32 %v886, 30
    %v888 = vsub.s32 %v884, %v887
    %vm889 = vcmp.lt.s32.totalorder %v888, 0
    %v890 = vsub.s32 0, %v888
    %v891 = vsel %vm889, %v890, %v888
    %v892 = vclz %v891
    %v893 = vsub.s32 %v892, 2
    %vm894 = vcmp.gt.s32.totalorder 0, %v893
    %v895 = vsel %vm894, 0, %v893
    %v896 = vsub.s32 32, %v895
    %v897 = vshll.u32 %v888, %v895
    %v898 = vshrl.u32 %v880, %v896
    %v899 = vor.u32 %v897, %v898
    %v900 = vsub.s32 4294967266, %v895
    %v901 = vadd.s32 %v900, 127
    %v902 = vshll.u32 %v901, 23
    %v903 = vor.u32 4788187, %v902
    %v904 = vand.u32 2147483647, %v903
    %v906 = vcvt.s32.f32 %v899
    %v907 = vmul.f32 %v906, %v904
    %v908 = vxor.u32 %v907, 2147483648
    %v909 = vsel %vm826, %v908, %v907
    %v910 = vsub.s32 4, %v886
    %v911 = vsel %vm826, %v910, %v886
    %v912 = vsel %vm825, %v408, %v909
    %v913 = vsel %vm825, 0, %v911
    %v914 = vcosq.f32.pop %v912
    %v915 = vsinq.f32.pop %v912
    %vm916 = vweird.f32 %v408
    %v917 = vand.u32 %v913, 3
    %vm918 = vcmp.lt.s32.totalorder %v917, 2
    %vm919 = vcmp.eq.s32.totalorder %v917, 0
    %v920 = vxor.u32 %v915, 2147483648
    %v921 = vsel %vm919, %v914, %v920
    %vm922 = vcmp.eq.s32.totalorder %v917, 2
    %v923 = vxor.u32 %v914, 2147483648
    %v924 = vsel %vm922, %v923, %v915
    %v925 = vsel %vm918, %v921, %v924
    %v926 = vsel %vm916, nan, %v925
    %v927 = vand.u32 2147483647, %v409
    %vm928 = vcmp.le.f32.partialorder %v927, 0.7853982
    %vm929 = vcmp.lt.s32.totalorder %v409, 0
    %v930 = vand.u32 %v409, 2139095040
    %v931 = vshrl.u32 %v930, 23
    %v932 = vsub.s32 %v931, 127
    %v933 = vand.u32 2147483647, %v409
    %v934 = vand.u32 %v933, 8388607
    %v935 = vor.u32 %v934, 8388608
    %v936 = vsub.s32 0, %v935
    %v937 = vadd.s32 %v932, 1
    %vm938 = vcmp.gt.s32.totalorder %v937, 0
    %v939 = vsel %vm938, %v937, 0
    %v940 = vshrl.u32 %v939, 5
    %v941 = vand.u32 %v939, 31
    %v942 = vsub.s32 32, %v941
    %v943 = vshrl.u32 683565275, %v942
    %v944 = vshll.u32 683565275, %v941
    %v945 = vshrl.u32 2475754826, %v942
    %v946 = vor.u32 %v944, %v945
    %v947 = vshll.u32 2475754826, %v941
    %v948 = vshrl.u32 2131351028, %v942
    %v949 = vor.u32 %v947, %v948
    %v950 = vshll.u32 2131351028, %v941
    %v951 = vshrl.u32 2102212464, %v942
    %v952 = vor.u32 %v950, %v951
    %v953 = vshll.u32 2102212464, %v941
    %v954 = vshrl.u32 920167782, %v942
    %v955 = vor.u32 %v953, %v954
    %v956 = vshll.u32 920167782, %v941
    %v957 = vshrl.u32 1326507024, %v942
    %v958 = vor.u32 %v956, %v957
    %vm959 = vcmp.lt.s32.totalorder %v940, 1
    %vm960 = vcmp.lt.s32.totalorder %v940, 2
    %vm961 = vcmp.lt.s32.totalorder %v940, 3
    %vm962 = vcmp.lt.s32.totalorder %v940, 4
    %v963 = vsel %vm959, %v943, %v946
    %v964 = vsel %vm962, %v952, 2102212464
    %v965 = vsel %vm961, %v949, %v964
    %v966 = vsel %vm960, %v963, %v965
    %v967 = vsel %vm959, %v946, %v949
    %v968 = vsel %vm962, %v955, 920167782
    %v969 = vsel %vm961, %v952, %v968
    %v970 = vsel %vm960, %v967, %v969
    %v971 = vsel %vm959, %v949, %v952
    %v972 = vsel %vm962, %v958, 1326507024
    %v973 = vsel %vm961, %v955, %v972
    %v974 = vsel %vm960, %v971, %v973
    %v975 = vshll.u32 %v935, 8
    %v976 = vmul.u32.u64.compose %v975, %v974
    %v977 = vextract.low.u32 %v976
    %v978 = vextract.high.u32 %v976
    %v979 = vmul.u32.u64.compose %v975, %v970
    %v980 = vextract.low.u32 %v979
    %v981 = vextract.high.u32 %v979
    %v982 = vmul.u32 %v975, %v966
    %v983 = vadd.s32 %v978, %v980
    %vm984 = vc.u32 %v978, %v980
    %v985 = vadd.s32 %v981, 1
    %v986 = vsel %vm984, %v985, %v981
    %v987 = vadd.s32 %v982, %v986
    %v988 = vadd.s32 %v987, 536870912
    %v989 = vshrl.u32 %v988, 30
    %v990 = vshll.u32 %v989, 30
    %v991 = vsub.s32 %v987, %v990
    %vm992 = vcmp.lt.s32.totalorder %v991, 0
    %v993 = vsub.s32 0, %v991
    %v994 = vsel %vm992, %v993, %v991
    %v995 = vclz %v994
    %v996 = vsub.s32 %v995, 2
    %vm997 = vcmp.gt.s32.totalorder 0, %v996
    %v998 = vsel %vm997, 0, %v996
    %v999 = vsub.s32 32, %v998
    %v1000 = vshll.u32 %v991, %v998
    %v1001 = vshrl.u32 %v983, %v999
    %v1002 = vor.u32 %v1000, %v1001
    %v1003 = vsub.s32 4294967266, %v998
    %v1004 = vadd.s32 %v1003, 127
    %v1005 = vshll.u32 %v1004, 23
    %v1006 = vor.u32 4788187, %v1005
    %v1007 = vand.u32 2147483647, %v1006
    %v1009 = vcvt.s32.f32 %v1002
    %v1010 = vmul.f32 %v1009, %v1007
    %v1011 = vxor.u32 %v1010, 2147483648
    %v1012 = vsel %vm929, %v1011, %v1010
    %v1013 = vsub.s32 4, %v989
    %v1014 = vsel %vm929, %v1013, %v989
    %v1015 = vsel %vm928, %v409, %v1012
    %v1016 = vsel %vm928, 0, %v1014
    %v1017 = vcosq.f32.pop %v1015
    %v1018 = vsinq.f32.pop %v1015
    %vm1019 = vweird.f32 %v409
    %v1020 = vand.u32 %v1016, 3
    %vm1021 = vcmp.lt.s32.totalorder %v1020, 2
    %vm1022 = vcmp.eq.s32.totalorder %v1020, 0
    %v1023 = vxor.u32 %v1018, 2147483648
    %v1024 = vsel %vm1022, %v1017, %v1023
    %vm1025 = vcmp.eq.s32.totalorder %v1020, 2
    %v1026 = vxor.u32 %v1017, 2147483648
    %v1027 = vsel %vm1025, %v1026, %v1018
    %v1028 = vsel %vm1021, %v1024, %v1027
    %v1029 = vsel %vm1019, nan, %v1028
    %v1030 = vand.u32 2147483647, %v410
    %vm1031 = vcmp.le.f32.partialorder %v1030, 0.7853982
    %vm1032 = vcmp.lt.s32.totalorder %v410, 0
    %v1033 = vand.u32 %v410, 2139095040
    %v1034 = vshrl.u32 %v1033, 23
    %v1035 = vsub.s32 %v1034, 127
    %v1036 = vand.u32 2147483647, %v410
    %v1037 = vand.u32 %v1036, 8388607
    %v1038 = vor.u32 %v1037, 8388608
    %v1039 = vsub.s32 0, %v1038
    %v1040 = vadd.s32 %v1035, 1
    %vm1041 = vcmp.gt.s32.totalorder %v1040, 0
    %v1042 = vsel %vm1041, %v1040, 0
    %v1043 = vshrl.u32 %v1042, 5
    %v1044 = vand.u32 %v1042, 31
    %v1045 = vsub.s32 32, %v1044
    %v1046 = vshrl.u32 683565275, %v1045
    %v1047 = vshll.u32 683565275, %v1044
    %v1048 = vshrl.u32 2475754826, %v1045
    %v1049 = vor.u32 %v1047, %v1048
    %v1050 = vshll.u32 2475754826, %v1044
    %v1051 = vshrl.u32 2131351028, %v1045
    %v1052 = vor.u32 %v1050, %v1051
    %v1053 = vshll.u32 2131351028, %v1044
    %v1054 = vshrl.u32 2102212464, %v1045
    %v1055 = vor.u32 %v1053, %v1054
    %v1056 = vshll.u32 2102212464, %v1044
    %v1057 = vshrl.u32 920167782, %v1045
    %v1058 = vor.u32 %v1056, %v1057
    %v1059 = vshll.u32 920167782, %v1044
    %v1060 = vshrl.u32 1326507024, %v1045
    %v1061 = vor.u32 %v1059, %v1060
    %vm1062 = vcmp.lt.s32.totalorder %v1043, 1
    %vm1063 = vcmp.lt.s32.totalorder %v1043, 2
    %vm1064 = vcmp.lt.s32.totalorder %v1043, 3
    %vm1065 = vcmp.lt.s32.totalorder %v1043, 4
    %v1066 = vsel %vm1062, %v1046, %v1049
    %v1067 = vsel %vm1065, %v1055, 2102212464
    %v1068 = vsel %vm1064, %v1052, %v1067
    %v1069 = vsel %vm1063, %v1066, %v1068
    %v1070 = vsel %vm1062, %v1049, %v1052
    %v1071 = vsel %vm1065, %v1058, 920167782
    %v1072 = vsel %vm1064, %v1055, %v1071
    %v1073 = vsel %vm1063, %v1070, %v1072
    %v1074 = vsel %vm1062, %v1052, %v1055
    %v1075 = vsel %vm1065, %v1061, 1326507024
    %v1076 = vsel %vm1064, %v1058, %v1075
    %v1077 = vsel %vm1063, %v1074, %v1076
    %v1078 = vshll.u32 %v1038, 8
    %v1079 = vmul.u32.u64.compose %v1078, %v1077
    %v1080 = vextract.low.u32 %v1079
    %v1081 = vextract.high.u32 %v1079
    %v1082 = vmul.u32.u64.compose %v1078, %v1073
    %v1083 = vextract.low.u32 %v1082
    %v1084 = vextract.high.u32 %v1082
    %v1085 = vmul.u32 %v1078, %v1069
    %v1086 = vadd.s32 %v1081, %v1083
    %vm1087 = vc.u32 %v1081, %v1083
    %v1088 = vadd.s32 %v1084, 1
    %v1089 = vsel %vm1087, %v1088, %v1084
    %v1090 = vadd.s32 %v1085, %v1089
    %v1091 = vadd.s32 %v1090, 536870912
    %v1092 = vshrl.u32 %v1091, 30
    %v1093 = vshll.u32 %v1092, 30
    %v1094 = vsub.s32 %v1090, %v1093
    %vm1095 = vcmp.lt.s32.totalorder %v1094, 0
    %v1096 = vsub.s32 0, %v1094
    %v1097 = vsel %vm1095, %v1096, %v1094
    %v1098 = vclz %v1097
    %v1099 = vsub.s32 %v1098, 2
    %vm1100 = vcmp.gt.s32.totalorder 0, %v1099
    %v1101 = vsel %vm1100, 0, %v1099
    %v1102 = vsub.s32 32, %v1101
    %v1103 = vshll.u32 %v1094, %v1101
    %v1104 = vshrl.u32 %v1086, %v1102
    %v1105 = vor.u32 %v1103, %v1104
    %v1106 = vsub.s32 4294967266, %v1101
    %v1107 = vadd.s32 %v1106, 127
    %v1108 = vshll.u32 %v1107, 23
    %v1109 = vor.u32 4788187, %v1108
    %v1110 = vand.u32 2147483647, %v1109
    %v1112 = vcvt.s32.f32 %v1105
    %v1113 = vmul.f32 %v1112, %v1110
    %v1114 = vxor.u32 %v1113, 2147483648
    %v1115 = vsel %vm1032, %v1114, %v1113
    %v1116 = vsub.s32 4, %v1092
    %v1117 = vsel %vm1032, %v1116, %v1092
    %v1118 = vsel %vm1031, %v410, %v1115
    %v1119 = vsel %vm1031, 0, %v1117
    %v1120 = vcosq.f32.pop %v1118
    %v1121 = vsinq.f32.pop %v1118
    %vm1122 = vweird.f32 %v410
    %v1123 = vand.u32 %v1119, 3
    %vm1124 = vcmp.lt.s32.totalorder %v1123, 2
    %vm1125 = vcmp.eq.s32.totalorder %v1123, 0
    %v1126 = vxor.u32 %v1121, 2147483648
    %v1127 = vsel %vm1125, %v1120, %v1126
    %vm1128 = vcmp.eq.s32.totalorder %v1123, 2
    %v1129 = vxor.u32 %v1120, 2147483648
    %v1130 = vsel %vm1128, %v1129, %v1121
    %v1131 = vsel %vm1124, %v1127, %v1130
    %v1132 = vsel %vm1122, nan, %v1131
    %v1133 = vand.u32 2147483647, %v411
    %vm1134 = vcmp.le.f32.partialorder %v1133, 0.7853982
    %vm1135 = vcmp.lt.s32.totalorder %v411, 0
    %v1136 = vand.u32 %v411, 2139095040
    %v1137 = vshrl.u32 %v1136, 23
    %v1138 = vsub.s32 %v1137, 127
    %v1139 = vand.u32 2147483647, %v411
    %v1140 = vand.u32 %v1139, 8388607
    %v1141 = vor.u32 %v1140, 8388608
    %v1142 = vsub.s32 0, %v1141
    %v1143 = vadd.s32 %v1138, 1
    %vm1144 = vcmp.gt.s32.totalorder %v1143, 0
    %v1145 = vsel %vm1144, %v1143, 0
    %v1146 = vshrl.u32 %v1145, 5
    %v1147 = vand.u32 %v1145, 31
    %v1148 = vsub.s32 32, %v1147
    %v1149 = vshrl.u32 683565275, %v1148
    %v1150 = vshll.u32 683565275, %v1147
    %v1151 = vshrl.u32 2475754826, %v1148
    %v1152 = vor.u32 %v1150, %v1151
    %v1153 = vshll.u32 2475754826, %v1147
    %v1154 = vshrl.u32 2131351028, %v1148
    %v1155 = vor.u32 %v1153, %v1154
    %v1156 = vshll.u32 2131351028, %v1147
    %v1157 = vshrl.u32 2102212464, %v1148
    %v1158 = vor.u32 %v1156, %v1157
    %v1159 = vshll.u32 2102212464, %v1147
    %v1160 = vshrl.u32 920167782, %v1148
    %v1161 = vor.u32 %v1159, %v1160
    %v1162 = vshll.u32 920167782, %v1147
    %v1163 = vshrl.u32 1326507024, %v1148
    %v1164 = vor.u32 %v1162, %v1163
    %vm1165 = vcmp.lt.s32.totalorder %v1146, 1
    %vm1166 = vcmp.lt.s32.totalorder %v1146, 2
    %vm1167 = vcmp.lt.s32.totalorder %v1146, 3
    %vm1168 = vcmp.lt.s32.totalorder %v1146, 4
    %v1169 = vsel %vm1165, %v1149, %v1152
    %v1170 = vsel %vm1168, %v1158, 2102212464
    %v1171 = vsel %vm1167, %v1155, %v1170
    %v1172 = vsel %vm1166, %v1169, %v1171
    %v1173 = vsel %vm1165, %v1152, %v1155
    %v1174 = vsel %vm1168, %v1161, 920167782
    %v1175 = vsel %vm1167, %v1158, %v1174
    %v1176 = vsel %vm1166, %v1173, %v1175
    %v1177 = vsel %vm1165, %v1155, %v1158
    %v1178 = vsel %vm1168, %v1164, 1326507024
    %v1179 = vsel %vm1167, %v1161, %v1178
    %v1180 = vsel %vm1166, %v1177, %v1179
    %v1181 = vshll.u32 %v1141, 8
    %v1182 = vmul.u32.u64.compose %v1181, %v1180
    %v1183 = vextract.low.u32 %v1182
    %v1184 = vextract.high.u32 %v1182
    %v1185 = vmul.u32.u64.compose %v1181, %v1176
    %v1186 = vextract.low.u32 %v1185
    %v1187 = vextract.high.u32 %v1185
    %v1188 = vmul.u32 %v1181, %v1172
    %v1189 = vadd.s32 %v1184, %v1186
    %vm1190 = vc.u32 %v1184, %v1186
    %v1191 = vadd.s32 %v1187, 1
    %v1192 = vsel %vm1190, %v1191, %v1187
    %v1193 = vadd.s32 %v1188, %v1192
    %v1194 = vadd.s32 %v1193, 536870912
    %v1195 = vshrl.u32 %v1194, 30
    %v1196 = vshll.u32 %v1195, 30
    %v1197 = vsub.s32 %v1193, %v1196
    %vm1198 = vcmp.lt.s32.totalorder %v1197, 0
    %v1199 = vsub.s32 0, %v1197
    %v1200 = vsel %vm1198, %v1199, %v1197
    %v1201 = vclz %v1200
    %v1202 = vsub.s32 %v1201, 2
    %vm1203 = vcmp.gt.s32.totalorder 0, %v1202
    %v1204 = vsel %vm1203, 0, %v1202
    %v1205 = vsub.s32 32, %v1204
    %v1206 = vshll.u32 %v1197, %v1204
    %v1207 = vshrl.u32 %v1189, %v1205
    %v1208 = vor.u32 %v1206, %v1207
    %v1209 = vsub.s32 4294967266, %v1204
    %v1210 = vadd.s32 %v1209, 127
    %v1211 = vshll.u32 %v1210, 23
    %v1212 = vor.u32 4788187, %v1211
    %v1213 = vand.u32 2147483647, %v1212
    %v1215 = vcvt.s32.f32 %v1208
    %v1216 = vmul.f32 %v1215, %v1213
    %v1217 = vxor.u32 %v1216, 2147483648
    %v1218 = vsel %vm1135, %v1217, %v1216
    %v1219 = vsub.s32 4, %v1195
    %v1220 = vsel %vm1135, %v1219, %v1195
    %v1221 = vsel %vm1134, %v411, %v1218
    %v1222 = vsel %vm1134, 0, %v1220
    %v1223 = vcosq.f32.pop %v1221
    %v1224 = vsinq.f32.pop %v1221
    %vm1225 = vweird.f32 %v411
    %v1226 = vand.u32 %v1222, 3
    %vm1227 = vcmp.lt.s32.totalorder %v1226, 2
    %vm1228 = vcmp.eq.s32.totalorder %v1226, 0
    %v1229 = vxor.u32 %v1224, 2147483648
    %v1230 = vsel %vm1228, %v1223, %v1229
    %vm1231 = vcmp.eq.s32.totalorder %v1226, 2
    %v1232 = vxor.u32 %v1223, 2147483648
    %v1233 = vsel %vm1231, %v1232, %v1224
    %v1234 = vsel %vm1227, %v1230, %v1233
    %v1235 = vsel %vm1225, nan, %v1234
    %v1236 = vmul.f32 %v396, %v514
    %v1237 = vmul.f32 %v397, %v617
    %v1238 = vmul.f32 %v398, %v720
    %v1239 = vmul.f32 %v399, %v823
    %v1240 = vmul.f32 %v400, %v926
    %v1241 = vmul.f32 %v401, %v1029
    %v1242 = vmul.f32 %v402, %v1132
    %v1243 = vmul.f32 %v403, %v1235
    %v1244 = vand.u32 2147483647, %v404
    %vm1245 = vcmp.le.f32.partialorder %v1244, 0.7853982
    %vm1246 = vcmp.lt.s32.totalorder %v404, 0
    %v1247 = vand.u32 %v404, 2139095040
    %v1248 = vshrl.u32 %v1247, 23
    %v1249 = vsub.s32 %v1248, 127
    %v1250 = vand.u32 2147483647, %v404
    %v1251 = vand.u32 %v1250, 8388607
    %v1252 = vor.u32 %v1251, 8388608
    %v1253 = vsub.s32 0, %v1252
    %v1254 = vadd.s32 %v1249, 1
    %vm1255 = vcmp.gt.s32.totalorder %v1254, 0
    %v1256 = vsel %vm1255, %v1254, 0
    %v1257 = vshrl.u32 %v1256, 5
    %v1258 = vand.u32 %v1256, 31
    %v1259 = vsub.s32 32, %v1258
    %v1260 = vshrl.u32 683565275, %v1259
    %v1261 = vshll.u32 683565275, %v1258
    %v1262 = vshrl.u32 2475754826, %v1259
    %v1263 = vor.u32 %v1261, %v1262
    %v1264 = vshll.u32 2475754826, %v1258
    %v1265 = vshrl.u32 2131351028, %v1259
    %v1266 = vor.u32 %v1264, %v1265
    %v1267 = vshll.u32 2131351028, %v1258
    %v1268 = vshrl.u32 2102212464, %v1259
    %v1269 = vor.u32 %v1267, %v1268
    %v1270 = vshll.u32 2102212464, %v1258
    %v1271 = vshrl.u32 920167782, %v1259
    %v1272 = vor.u32 %v1270, %v1271
    %v1273 = vshll.u32 920167782, %v1258
    %v1274 = vshrl.u32 1326507024, %v1259
    %v1275 = vor.u32 %v1273, %v1274
    %vm1276 = vcmp.lt.s32.totalorder %v1257, 1
    %vm1277 = vcmp.lt.s32.totalorder %v1257, 2
    %vm1278 = vcmp.lt.s32.totalorder %v1257, 3
    %vm1279 = vcmp.lt.s32.totalorder %v1257, 4
    %v1280 = vsel %vm1276, %v1260, %v1263
    %v1281 = vsel %vm1279, %v1269, 2102212464
    %v1282 = vsel %vm1278, %v1266, %v1281
    %v1283 = vsel %vm1277, %v1280, %v1282
    %v1284 = vsel %vm1276, %v1263, %v1266
    %v1285 = vsel %vm1279, %v1272, 920167782
    %v1286 = vsel %vm1278, %v1269, %v1285
    %v1287 = vsel %vm1277, %v1284, %v1286
    %v1288 = vsel %vm1276, %v1266, %v1269
    %v1289 = vsel %vm1279, %v1275, 1326507024
    %v1290 = vsel %vm1278, %v1272, %v1289
    %v1291 = vsel %vm1277, %v1288, %v1290
    %v1292 = vshll.u32 %v1252, 8
    %v1293 = vmul.u32.u64.compose %v1292, %v1291
    %v1294 = vextract.low.u32 %v1293
    %v1295 = vextract.high.u32 %v1293
    %v1296 = vmul.u32.u64.compose %v1292, %v1287
    %v1297 = vextract.low.u32 %v1296
    %v1298 = vextract.high.u32 %v1296
    %v1299 = vmul.u32 %v1292, %v1283
    %v1300 = vadd.s32 %v1295, %v1297
    %vm1301 = vc.u32 %v1295, %v1297
    %v1302 = vadd.s32 %v1298, 1
    %v1303 = vsel %vm1301, %v1302, %v1298
    %v1304 = vadd.s32 %v1299, %v1303
    %v1305 = vadd.s32 %v1304, 536870912
    %v1306 = vshrl.u32 %v1305, 30
    %v1307 = vshll.u32 %v1306, 30
    %v1308 = vsub.s32 %v1304, %v1307
    %vm1309 = vcmp.lt.s32.totalorder %v1308, 0
    %v1310 = vsub.s32 0, %v1308
    %v1311 = vsel %vm1309, %v1310, %v1308
    %v1312 = vclz %v1311
    %v1313 = vsub.s32 %v1312, 2
    %vm1314 = vcmp.gt.s32.totalorder 0, %v1313
    %v1315 = vsel %vm1314, 0, %v1313
    %v1316 = vsub.s32 32, %v1315
    %v1317 = vshll.u32 %v1308, %v1315
    %v1318 = vshrl.u32 %v1300, %v1316
    %v1319 = vor.u32 %v1317, %v1318
    %v1320 = vsub.s32 4294967266, %v1315
    %v1321 = vadd.s32 %v1320, 127
    %v1322 = vshll.u32 %v1321, 23
    %v1323 = vor.u32 4788187, %v1322
    %v1324 = vand.u32 2147483647, %v1323
    %v1326 = vcvt.s32.f32 %v1319
    %v1327 = vmul.f32 %v1326, %v1324
    %v1328 = vxor.u32 %v1327, 2147483648
    %v1329 = vsel %vm1246, %v1328, %v1327
    %v1330 = vsub.s32 4, %v1306
    %v1331 = vsel %vm1246, %v1330, %v1306
    %v1332 = vsel %vm1245, %v404, %v1329
    %v1333 = vsel %vm1245, 0, %v1331
    %v1334 = vcosq.f32.pop %v1332
    %v1335 = vsinq.f32.pop %v1332
    %vm1336 = vweird.f32 %v404
    %v1337 = vadd.s32 %v1333, 3
    %v1338 = vand.u32 %v1337, 3
    %vm1339 = vcmp.lt.s32.totalorder %v1338, 2
    %vm1340 = vcmp.eq.s32.totalorder %v1338, 0
    %v1341 = vxor.u32 %v1335, 2147483648
    %v1342 = vsel %vm1340, %v1334, %v1341
    %vm1343 = vcmp.eq.s32.totalorder %v1338, 2
    %v1344 = vxor.u32 %v1334, 2147483648
    %v1345 = vsel %vm1343, %v1344, %v1335
    %v1346 = vsel %vm1339, %v1342, %v1345
    %v1347 = vsel %vm1336, nan, %v1346
    %v1348 = vand.u32 2147483647, %v405
    %vm1349 = vcmp.le.f32.partialorder %v1348, 0.7853982
    %vm1350 = vcmp.lt.s32.totalorder %v405, 0
    %v1351 = vand.u32 %v405, 2139095040
    %v1352 = vshrl.u32 %v1351, 23
    %v1353 = vsub.s32 %v1352, 127
    %v1354 = vand.u32 2147483647, %v405
    %v1355 = vand.u32 %v1354, 8388607
    %v1356 = vor.u32 %v1355, 8388608
    %v1357 = vsub.s32 0, %v1356
    %v1358 = vadd.s32 %v1353, 1
    %vm1359 = vcmp.gt.s32.totalorder %v1358, 0
    %v1360 = vsel %vm1359, %v1358, 0
    %v1361 = vshrl.u32 %v1360, 5
    %v1362 = vand.u32 %v1360, 31
    %v1363 = vsub.s32 32, %v1362
    %v1364 = vshrl.u32 683565275, %v1363
    %v1365 = vshll.u32 683565275, %v1362
    %v1366 = vshrl.u32 2475754826, %v1363
    %v1367 = vor.u32 %v1365, %v1366
    %v1368 = vshll.u32 2475754826, %v1362
    %v1369 = vshrl.u32 2131351028, %v1363
    %v1370 = vor.u32 %v1368, %v1369
    %v1371 = vshll.u32 2131351028, %v1362
    %v1372 = vshrl.u32 2102212464, %v1363
    %v1373 = vor.u32 %v1371, %v1372
    %v1374 = vshll.u32 2102212464, %v1362
    %v1375 = vshrl.u32 920167782, %v1363
    %v1376 = vor.u32 %v1374, %v1375
    %v1377 = vshll.u32 920167782, %v1362
    %v1378 = vshrl.u32 1326507024, %v1363
    %v1379 = vor.u32 %v1377, %v1378
    %vm1380 = vcmp.lt.s32.totalorder %v1361, 1
    %vm1381 = vcmp.lt.s32.totalorder %v1361, 2
    %vm1382 = vcmp.lt.s32.totalorder %v1361, 3
    %vm1383 = vcmp.lt.s32.totalorder %v1361, 4
    %v1384 = vsel %vm1380, %v1364, %v1367
    %v1385 = vsel %vm1383, %v1373, 2102212464
    %v1386 = vsel %vm1382, %v1370, %v1385
    %v1387 = vsel %vm1381, %v1384, %v1386
    %v1388 = vsel %vm1380, %v1367, %v1370
    %v1389 = vsel %vm1383, %v1376, 920167782
    %v1390 = vsel %vm1382, %v1373, %v1389
    %v1391 = vsel %vm1381, %v1388, %v1390
    %v1392 = vsel %vm1380, %v1370, %v1373
    %v1393 = vsel %vm1383, %v1379, 1326507024
    %v1394 = vsel %vm1382, %v1376, %v1393
    %v1395 = vsel %vm1381, %v1392, %v1394
    %v1396 = vshll.u32 %v1356, 8
    %v1397 = vmul.u32.u64.compose %v1396, %v1395
    %v1398 = vextract.low.u32 %v1397
    %v1399 = vextract.high.u32 %v1397
    %v1400 = vmul.u32.u64.compose %v1396, %v1391
    %v1401 = vextract.low.u32 %v1400
    %v1402 = vextract.high.u32 %v1400
    %v1403 = vmul.u32 %v1396, %v1387
    %v1404 = vadd.s32 %v1399, %v1401
    %vm1405 = vc.u32 %v1399, %v1401
    %v1406 = vadd.s32 %v1402, 1
    %v1407 = vsel %vm1405, %v1406, %v1402
    %v1408 = vadd.s32 %v1403, %v1407
    %v1409 = vadd.s32 %v1408, 536870912
    %v1410 = vshrl.u32 %v1409, 30
    %v1411 = vshll.u32 %v1410, 30
    %v1412 = vsub.s32 %v1408, %v1411
    %vm1413 = vcmp.lt.s32.totalorder %v1412, 0
    %v1414 = vsub.s32 0, %v1412
    %v1415 = vsel %vm1413, %v1414, %v1412
    %v1416 = vclz %v1415
    %v1417 = vsub.s32 %v1416, 2
    %vm1418 = vcmp.gt.s32.totalorder 0, %v1417
    %v1419 = vsel %vm1418, 0, %v1417
    %v1420 = vsub.s32 32, %v1419
    %v1421 = vshll.u32 %v1412, %v1419
    %v1422 = vshrl.u32 %v1404, %v1420
    %v1423 = vor.u32 %v1421, %v1422
    %v1424 = vsub.s32 4294967266, %v1419
    %v1425 = vadd.s32 %v1424, 127
    %v1426 = vshll.u32 %v1425, 23
    %v1427 = vor.u32 4788187, %v1426
    %v1428 = vand.u32 2147483647, %v1427
    %v1430 = vcvt.s32.f32 %v1423
    %v1431 = vmul.f32 %v1430, %v1428
    %v1432 = vxor.u32 %v1431, 2147483648
    %v1433 = vsel %vm1350, %v1432, %v1431
    %v1434 = vsub.s32 4, %v1410
    %v1435 = vsel %vm1350, %v1434, %v1410
    %v1436 = vsel %vm1349, %v405, %v1433
    %v1437 = vsel %vm1349, 0, %v1435
    %v1438 = vcosq.f32.pop %v1436
    %v1439 = vsinq.f32.pop %v1436
    %vm1440 = vweird.f32 %v405
    %v1441 = vadd.s32 %v1437, 3
    %v1442 = vand.u32 %v1441, 3
    %vm1443 = vcmp.lt.s32.totalorder %v1442, 2
    %vm1444 = vcmp.eq.s32.totalorder %v1442, 0
    %v1445 = vxor.u32 %v1439, 2147483648
    %v1446 = vsel %vm1444, %v1438, %v1445
    %vm1447 = vcmp.eq.s32.totalorder %v1442, 2
    %v1448 = vxor.u32 %v1438, 2147483648
    %v1449 = vsel %vm1447, %v1448, %v1439
    %v1450 = vsel %vm1443, %v1446, %v1449
    %v1451 = vsel %vm1440, nan, %v1450
    %v1452 = vand.u32 2147483647, %v406
    %vm1453 = vcmp.le.f32.partialorder %v1452, 0.7853982
    %vm1454 = vcmp.lt.s32.totalorder %v406, 0
    %v1455 = vand.u32 %v406, 2139095040
    %v1456 = vshrl.u32 %v1455, 23
    %v1457 = vsub.s32 %v1456, 127
    %v1458 = vand.u32 2147483647, %v406
    %v1459 = vand.u32 %v1458, 8388607
    %v1460 = vor.u32 %v1459, 8388608
    %v1461 = vsub.s32 0, %v1460
    %v1462 = vadd.s32 %v1457, 1
    %vm1463 = vcmp.gt.s32.totalorder %v1462, 0
    %v1464 = vsel %vm1463, %v1462, 0
    %v1465 = vshrl.u32 %v1464, 5
    %v1466 = vand.u32 %v1464, 31
    %v1467 = vsub.s32 32, %v1466
    %v1468 = vshrl.u32 683565275, %v1467
    %v1469 = vshll.u32 683565275, %v1466
    %v1470 = vshrl.u32 2475754826, %v1467
    %v1471 = vor.u32 %v1469, %v1470
    %v1472 = vshll.u32 2475754826, %v1466
    %v1473 = vshrl.u32 2131351028, %v1467
    %v1474 = vor.u32 %v1472, %v1473
    %v1475 = vshll.u32 2131351028, %v1466
    %v1476 = vshrl.u32 2102212464, %v1467
    %v1477 = vor.u32 %v1475, %v1476
    %v1478 = vshll.u32 2102212464, %v1466
    %v1479 = vshrl.u32 920167782, %v1467
    %v1480 = vor.u32 %v1478, %v1479
    %v1481 = vshll.u32 920167782, %v1466
    %v1482 = vshrl.u32 1326507024, %v1467
    %v1483 = vor.u32 %v1481, %v1482
    %vm1484 = vcmp.lt.s32.totalorder %v1465, 1
    %vm1485 = vcmp.lt.s32.totalorder %v1465, 2
    %vm1486 = vcmp.lt.s32.totalorder %v1465, 3
    %vm1487 = vcmp.lt.s32.totalorder %v1465, 4
    %v1488 = vsel %vm1484, %v1468, %v1471
    %v1489 = vsel %vm1487, %v1477, 2102212464
    %v1490 = vsel %vm1486, %v1474, %v1489
    %v1491 = vsel %vm1485, %v1488, %v1490
    %v1492 = vsel %vm1484, %v1471, %v1474
    %v1493 = vsel %vm1487, %v1480, 920167782
    %v1494 = vsel %vm1486, %v1477, %v1493
    %v1495 = vsel %vm1485, %v1492, %v1494
    %v1496 = vsel %vm1484, %v1474, %v1477
    %v1497 = vsel %vm1487, %v1483, 1326507024
    %v1498 = vsel %vm1486, %v1480, %v1497
    %v1499 = vsel %vm1485, %v1496, %v1498
    %v1500 = vshll.u32 %v1460, 8
    %v1501 = vmul.u32.u64.compose %v1500, %v1499
    %v1502 = vextract.low.u32 %v1501
    %v1503 = vextract.high.u32 %v1501
    %v1504 = vmul.u32.u64.compose %v1500, %v1495
    %v1505 = vextract.low.u32 %v1504
    %v1506 = vextract.high.u32 %v1504
    %v1507 = vmul.u32 %v1500, %v1491
    %v1508 = vadd.s32 %v1503, %v1505
    %vm1509 = vc.u32 %v1503, %v1505
    %v1510 = vadd.s32 %v1506, 1
    %v1511 = vsel %vm1509, %v1510, %v1506
    %v1512 = vadd.s32 %v1507, %v1511
    %v1513 = vadd.s32 %v1512, 536870912
    %v1514 = vshrl.u32 %v1513, 30
    %v1515 = vshll.u32 %v1514, 30
    %v1516 = vsub.s32 %v1512, %v1515
    %vm1517 = vcmp.lt.s32.totalorder %v1516, 0
    %v1518 = vsub.s32 0, %v1516
    %v1519 = vsel %vm1517, %v1518, %v1516
    %v1520 = vclz %v1519
    %v1521 = vsub.s32 %v1520, 2
    %vm1522 = vcmp.gt.s32.totalorder 0, %v1521
    %v1523 = vsel %vm1522, 0, %v1521
    %v1524 = vsub.s32 32, %v1523
    %v1525 = vshll.u32 %v1516, %v1523
    %v1526 = vshrl.u32 %v1508, %v1524
    %v1527 = vor.u32 %v1525, %v1526
    %v1528 = vsub.s32 4294967266, %v1523
    %v1529 = vadd.s32 %v1528, 127
    %v1530 = vshll.u32 %v1529, 23
    %v1531 = vor.u32 4788187, %v1530
    %v1532 = vand.u32 2147483647, %v1531
    %v1534 = vcvt.s32.f32 %v1527
    %v1535 = vmul.f32 %v1534, %v1532
    %v1536 = vxor.u32 %v1535, 2147483648
    %v1537 = vsel %vm1454, %v1536, %v1535
    %v1538 = vsub.s32 4, %v1514
    %v1539 = vsel %vm1454, %v1538, %v1514
    %v1540 = vsel %vm1453, %v406, %v1537
    %v1541 = vsel %vm1453, 0, %v1539
    %v1542 = vcosq.f32.pop %v1540
    %v1543 = vsinq.f32.pop %v1540
    %vm1544 = vweird.f32 %v406
    %v1545 = vadd.s32 %v1541, 3
    %v1546 = vand.u32 %v1545, 3
    %vm1547 = vcmp.lt.s32.totalorder %v1546, 2
    %vm1548 = vcmp.eq.s32.totalorder %v1546, 0
    %v1549 = vxor.u32 %v1543, 2147483648
    %v1550 = vsel %vm1548, %v1542, %v1549
    %vm1551 = vcmp.eq.s32.totalorder %v1546, 2
    %v1552 = vxor.u32 %v1542, 2147483648
    %v1553 = vsel %vm1551, %v1552, %v1543
    %v1554 = vsel %vm1547, %v1550, %v1553
    %v1555 = vsel %vm1544, nan, %v1554
    %v1556 = vand.u32 2147483647, %v407
    %vm1557 = vcmp.le.f32.partialorder %v1556, 0.7853982
    %vm1558 = vcmp.lt.s32.totalorder %v407, 0
    %v1559 = vand.u32 %v407, 2139095040
    %v1560 = vshrl.u32 %v1559, 23
    %v1561 = vsub.s32 %v1560, 127
    %v1562 = vand.u32 2147483647, %v407
    %v1563 = vand.u32 %v1562, 8388607
    %v1564 = vor.u32 %v1563, 8388608
    %v1565 = vsub.s32 0, %v1564
    %v1566 = vadd.s32 %v1561, 1
    %vm1567 = vcmp.gt.s32.totalorder %v1566, 0
    %v1568 = vsel %vm1567, %v1566, 0
    %v1569 = vshrl.u32 %v1568, 5
    %v1570 = vand.u32 %v1568, 31
    %v1571 = vsub.s32 32, %v1570
    %v1572 = vshrl.u32 683565275, %v1571
    %v1573 = vshll.u32 683565275, %v1570
    %v1574 = vshrl.u32 2475754826, %v1571
    %v1575 = vor.u32 %v1573, %v1574
    %v1576 = vshll.u32 2475754826, %v1570
    %v1577 = vshrl.u32 2131351028, %v1571
    %v1578 = vor.u32 %v1576, %v1577
    %v1579 = vshll.u32 2131351028, %v1570
    %v1580 = vshrl.u32 2102212464, %v1571
    %v1581 = vor.u32 %v1579, %v1580
    %v1582 = vshll.u32 2102212464, %v1570
    %v1583 = vshrl.u32 920167782, %v1571
    %v1584 = vor.u32 %v1582, %v1583
    %v1585 = vshll.u32 920167782, %v1570
    %v1586 = vshrl.u32 1326507024, %v1571
    %v1587 = vor.u32 %v1585, %v1586
    %vm1588 = vcmp.lt.s32.totalorder %v1569, 1
    %vm1589 = vcmp.lt.s32.totalorder %v1569, 2
    %vm1590 = vcmp.lt.s32.totalorder %v1569, 3
    %vm1591 = vcmp.lt.s32.totalorder %v1569, 4
    %v1592 = vsel %vm1588, %v1572, %v1575
    %v1593 = vsel %vm1591, %v1581, 2102212464
    %v1594 = vsel %vm1590, %v1578, %v1593
    %v1595 = vsel %vm1589, %v1592, %v1594
    %v1596 = vsel %vm1588, %v1575, %v1578
    %v1597 = vsel %vm1591, %v1584, 920167782
    %v1598 = vsel %vm1590, %v1581, %v1597
    %v1599 = vsel %vm1589, %v1596, %v1598
    %v1600 = vsel %vm1588, %v1578, %v1581
    %v1601 = vsel %vm1591, %v1587, 1326507024
    %v1602 = vsel %vm1590, %v1584, %v1601
    %v1603 = vsel %vm1589, %v1600, %v1602
    %v1604 = vshll.u32 %v1564, 8
    %v1605 = vmul.u32.u64.compose %v1604, %v1603
    %v1606 = vextract.low.u32 %v1605
    %v1607 = vextract.high.u32 %v1605
    %v1608 = vmul.u32.u64.compose %v1604, %v1599
    %v1609 = vextract.low.u32 %v1608
    %v1610 = vextract.high.u32 %v1608
    %v1611 = vmul.u32 %v1604, %v1595
    %v1612 = vadd.s32 %v1607, %v1609
    %vm1613 = vc.u32 %v1607, %v1609
    %v1614 = vadd.s32 %v1610, 1
    %v1615 = vsel %vm1613, %v1614, %v1610
    %v1616 = vadd.s32 %v1611, %v1615
    %v1617 = vadd.s32 %v1616, 536870912
    %v1618 = vshrl.u32 %v1617, 30
    %v1619 = vshll.u32 %v1618, 30
    %v1620 = vsub.s32 %v1616, %v1619
    %vm1621 = vcmp.lt.s32.totalorder %v1620, 0
    %v1622 = vsub.s32 0, %v1620
    %v1623 = vsel %vm1621, %v1622, %v1620
    %v1624 = vclz %v1623
    %v1625 = vsub.s32 %v1624, 2
    %vm1626 = vcmp.gt.s32.totalorder 0, %v1625
    %v1627 = vsel %vm1626, 0, %v1625
    %v1628 = vsub.s32 32, %v1627
    %v1629 = vshll.u32 %v1620, %v1627
    %v1630 = vshrl.u32 %v1612, %v1628
    %v1631 = vor.u32 %v1629, %v1630
    %v1632 = vsub.s32 4294967266, %v1627
    %v1633 = vadd.s32 %v1632, 127
    %v1634 = vshll.u32 %v1633, 23
    %v1635 = vor.u32 4788187, %v1634
    %v1636 = vand.u32 2147483647, %v1635
    %v1638 = vcvt.s32.f32 %v1631
    %v1639 = vmul.f32 %v1638, %v1636
    %v1640 = vxor.u32 %v1639, 2147483648
    %v1641 = vsel %vm1558, %v1640, %v1639
    %v1642 = vsub.s32 4, %v1618
    %v1643 = vsel %vm1558, %v1642, %v1618
    %v1644 = vsel %vm1557, %v407, %v1641
    %v1645 = vsel %vm1557, 0, %v1643
    %v1646 = vcosq.f32.pop %v1644
    %v1647 = vsinq.f32.pop %v1644
    %vm1648 = vweird.f32 %v407
    %v1649 = vadd.s32 %v1645, 3
    %v1650 = vand.u32 %v1649, 3
    %vm1651 = vcmp.lt.s32.totalorder %v1650, 2
    %vm1652 = vcmp.eq.s32.totalorder %v1650, 0
    %v1653 = vxor.u32 %v1647, 2147483648
    %v1654 = vsel %vm1652, %v1646, %v1653
    %vm1655 = vcmp.eq.s32.totalorder %v1650, 2
    %v1656 = vxor.u32 %v1646, 2147483648
    %v1657 = vsel %vm1655, %v1656, %v1647
    %v1658 = vsel %vm1651, %v1654, %v1657
    %v1659 = vsel %vm1648, nan, %v1658
    %v1660 = vand.u32 2147483647, %v408
    %vm1661 = vcmp.le.f32.partialorder %v1660, 0.7853982
    %vm1662 = vcmp.lt.s32.totalorder %v408, 0
    %v1663 = vand.u32 %v408, 2139095040
    %v1664 = vshrl.u32 %v1663, 23
    %v1665 = vsub.s32 %v1664, 127
    %v1666 = vand.u32 2147483647, %v408
    %v1667 = vand.u32 %v1666, 8388607
    %v1668 = vor.u32 %v1667, 8388608
    %v1669 = vsub.s32 0, %v1668
    %v1670 = vadd.s32 %v1665, 1
    %vm1671 = vcmp.gt.s32.totalorder %v1670, 0
    %v1672 = vsel %vm1671, %v1670, 0
    %v1673 = vshrl.u32 %v1672, 5
    %v1674 = vand.u32 %v1672, 31
    %v1675 = vsub.s32 32, %v1674
    %v1676 = vshrl.u32 683565275, %v1675
    %v1677 = vshll.u32 683565275, %v1674
    %v1678 = vshrl.u32 2475754826, %v1675
    %v1679 = vor.u32 %v1677, %v1678
    %v1680 = vshll.u32 2475754826, %v1674
    %v1681 = vshrl.u32 2131351028, %v1675
    %v1682 = vor.u32 %v1680, %v1681
    %v1683 = vshll.u32 2131351028, %v1674
    %v1684 = vshrl.u32 2102212464, %v1675
    %v1685 = vor.u32 %v1683, %v1684
    %v1686 = vshll.u32 2102212464, %v1674
    %v1687 = vshrl.u32 920167782, %v1675
    %v1688 = vor.u32 %v1686, %v1687
    %v1689 = vshll.u32 920167782, %v1674
    %v1690 = vshrl.u32 1326507024, %v1675
    %v1691 = vor.u32 %v1689, %v1690
    %vm1692 = vcmp.lt.s32.totalorder %v1673, 1
    %vm1693 = vcmp.lt.s32.totalorder %v1673, 2
    %vm1694 = vcmp.lt.s32.totalorder %v1673, 3
    %vm1695 = vcmp.lt.s32.totalorder %v1673, 4
    %v1696 = vsel %vm1692, %v1676, %v1679
    %v1697 = vsel %vm1695, %v1685, 2102212464
    %v1698 = vsel %vm1694, %v1682, %v1697
    %v1699 = vsel %vm1693, %v1696, %v1698
    %v1700 = vsel %vm1692, %v1679, %v1682
    %v1701 = vsel %vm1695, %v1688, 920167782
    %v1702 = vsel %vm1694, %v1685, %v1701
    %v1703 = vsel %vm1693, %v1700, %v1702
    %v1704 = vsel %vm1692, %v1682, %v1685
    %v1705 = vsel %vm1695, %v1691, 1326507024
    %v1706 = vsel %vm1694, %v1688, %v1705
    %v1707 = vsel %vm1693, %v1704, %v1706
    %v1708 = vshll.u32 %v1668, 8
    %v1709 = vmul.u32.u64.compose %v1708, %v1707
    %v1710 = vextract.low.u32 %v1709
    %v1711 = vextract.high.u32 %v1709
    %v1712 = vmul.u32.u64.compose %v1708, %v1703
    %v1713 = vextract.low.u32 %v1712
    %v1714 = vextract.high.u32 %v1712
    %v1715 = vmul.u32 %v1708, %v1699
    %v1716 = vadd.s32 %v1711, %v1713
    %vm1717 = vc.u32 %v1711, %v1713
    %v1718 = vadd.s32 %v1714, 1
    %v1719 = vsel %vm1717, %v1718, %v1714
    %v1720 = vadd.s32 %v1715, %v1719
    %v1721 = vadd.s32 %v1720, 536870912
    %v1722 = vshrl.u32 %v1721, 30
    %v1723 = vshll.u32 %v1722, 30
    %v1724 = vsub.s32 %v1720, %v1723
    %vm1725 = vcmp.lt.s32.totalorder %v1724, 0
    %v1726 = vsub.s32 0, %v1724
    %v1727 = vsel %vm1725, %v1726, %v1724
    %v1728 = vclz %v1727
    %v1729 = vsub.s32 %v1728, 2
    %vm1730 = vcmp.gt.s32.totalorder 0, %v1729
    %v1731 = vsel %vm1730, 0, %v1729
    %v1732 = vsub.s32 32, %v1731
    %v1733 = vshll.u32 %v1724, %v1731
    %v1734 = vshrl.u32 %v1716, %v1732
    %v1735 = vor.u32 %v1733, %v1734
    %v1736 = vsub.s32 4294967266, %v1731
    %v1737 = vadd.s32 %v1736, 127
    %v1738 = vshll.u32 %v1737, 23
    %v1739 = vor.u32 4788187, %v1738
    %v1740 = vand.u32 2147483647, %v1739
    %v1742 = vcvt.s32.f32 %v1735
    %v1743 = vmul.f32 %v1742, %v1740
    %v1744 = vxor.u32 %v1743, 2147483648
    %v1745 = vsel %vm1662, %v1744, %v1743
    %v1746 = vsub.s32 4, %v1722
    %v1747 = vsel %vm1662, %v1746, %v1722
    %v1748 = vsel %vm1661, %v408, %v1745
    %v1749 = vsel %vm1661, 0, %v1747
    %v1750 = vcosq.f32.pop %v1748
    %v1751 = vsinq.f32.pop %v1748
    %vm1752 = vweird.f32 %v408
    %v1753 = vadd.s32 %v1749, 3
    %v1754 = vand.u32 %v1753, 3
    %vm1755 = vcmp.lt.s32.totalorder %v1754, 2
    %vm1756 = vcmp.eq.s32.totalorder %v1754, 0
    %v1757 = vxor.u32 %v1751, 2147483648
    %v1758 = vsel %vm1756, %v1750, %v1757
    %vm1759 = vcmp.eq.s32.totalorder %v1754, 2
    %v1760 = vxor.u32 %v1750, 2147483648
    %v1761 = vsel %vm1759, %v1760, %v1751
    %v1762 = vsel %vm1755, %v1758, %v1761
    %v1763 = vsel %vm1752, nan, %v1762
    %v1764 = vand.u32 2147483647, %v409
    %vm1765 = vcmp.le.f32.partialorder %v1764, 0.7853982
    %vm1766 = vcmp.lt.s32.totalorder %v409, 0
    %v1767 = vand.u32 %v409, 2139095040
    %v1768 = vshrl.u32 %v1767, 23
    %v1769 = vsub.s32 %v1768, 127
    %v1770 = vand.u32 2147483647, %v409
    %v1771 = vand.u32 %v1770, 8388607
    %v1772 = vor.u32 %v1771, 8388608
    %v1773 = vsub.s32 0, %v1772
    %v1774 = vadd.s32 %v1769, 1
    %vm1775 = vcmp.gt.s32.totalorder %v1774, 0
    %v1776 = vsel %vm1775, %v1774, 0
    %v1777 = vshrl.u32 %v1776, 5
    %v1778 = vand.u32 %v1776, 31
    %v1779 = vsub.s32 32, %v1778
    %v1780 = vshrl.u32 683565275, %v1779
    %v1781 = vshll.u32 683565275, %v1778
    %v1782 = vshrl.u32 2475754826, %v1779
    %v1783 = vor.u32 %v1781, %v1782
    %v1784 = vshll.u32 2475754826, %v1778
    %v1785 = vshrl.u32 2131351028, %v1779
    %v1786 = vor.u32 %v1784, %v1785
    %v1787 = vshll.u32 2131351028, %v1778
    %v1788 = vshrl.u32 2102212464, %v1779
    %v1789 = vor.u32 %v1787, %v1788
    %v1790 = vshll.u32 2102212464, %v1778
    %v1791 = vshrl.u32 920167782, %v1779
    %v1792 = vor.u32 %v1790, %v1791
    %v1793 = vshll.u32 920167782, %v1778
    %v1794 = vshrl.u32 1326507024, %v1779
    %v1795 = vor.u32 %v1793, %v1794
    %vm1796 = vcmp.lt.s32.totalorder %v1777, 1
    %vm1797 = vcmp.lt.s32.totalorder %v1777, 2
    %vm1798 = vcmp.lt.s32.totalorder %v1777, 3
    %vm1799 = vcmp.lt.s32.totalorder %v1777, 4
    %v1800 = vsel %vm1796, %v1780, %v1783
    %v1801 = vsel %vm1799, %v1789, 2102212464
    %v1802 = vsel %vm1798, %v1786, %v1801
    %v1803 = vsel %vm1797, %v1800, %v1802
    %v1804 = vsel %vm1796, %v1783, %v1786
    %v1805 = vsel %vm1799, %v1792, 920167782
    %v1806 = vsel %vm1798, %v1789, %v1805
    %v1807 = vsel %vm1797, %v1804, %v1806
    %v1808 = vsel %vm1796, %v1786, %v1789
    %v1809 = vsel %vm1799, %v1795, 1326507024
    %v1810 = vsel %vm1798, %v1792, %v1809
    %v1811 = vsel %vm1797, %v1808, %v1810
    %v1812 = vshll.u32 %v1772, 8
    %v1813 = vmul.u32.u64.compose %v1812, %v1811
    %v1814 = vextract.low.u32 %v1813
    %v1815 = vextract.high.u32 %v1813
    %v1816 = vmul.u32.u64.compose %v1812, %v1807
    %v1817 = vextract.low.u32 %v1816
    %v1818 = vextract.high.u32 %v1816
    %v1819 = vmul.u32 %v1812, %v1803
    %v1820 = vadd.s32 %v1815, %v1817
    %vm1821 = vc.u32 %v1815, %v1817
    %v1822 = vadd.s32 %v1818, 1
    %v1823 = vsel %vm1821, %v1822, %v1818
    %v1824 = vadd.s32 %v1819, %v1823
    %v1825 = vadd.s32 %v1824, 536870912
    %v1826 = vshrl.u32 %v1825, 30
    %v1827 = vshll.u32 %v1826, 30
    %v1828 = vsub.s32 %v1824, %v1827
    %vm1829 = vcmp.lt.s32.totalorder %v1828, 0
    %v1830 = vsub.s32 0, %v1828
    %v1831 = vsel %vm1829, %v1830, %v1828
    %v1832 = vclz %v1831
    %v1833 = vsub.s32 %v1832, 2
    %vm1834 = vcmp.gt.s32.totalorder 0, %v1833
    %v1835 = vsel %vm1834, 0, %v1833
    %v1836 = vsub.s32 32, %v1835
    %v1837 = vshll.u32 %v1828, %v1835
    %v1838 = vshrl.u32 %v1820, %v1836
    %v1839 = vor.u32 %v1837, %v1838
    %v1840 = vsub.s32 4294967266, %v1835
    %v1841 = vadd.s32 %v1840, 127
    %v1842 = vshll.u32 %v1841, 23
    %v1843 = vor.u32 4788187, %v1842
    %v1844 = vand.u32 2147483647, %v1843
    %v1846 = vcvt.s32.f32 %v1839
    %v1847 = vmul.f32 %v1846, %v1844
    %v1848 = vxor.u32 %v1847, 2147483648
    %v1849 = vsel %vm1766, %v1848, %v1847
    %v1850 = vsub.s32 4, %v1826
    %v1851 = vsel %vm1766, %v1850, %v1826
    %v1852 = vsel %vm1765, %v409, %v1849
    %v1853 = vsel %vm1765, 0, %v1851
    %v1854 = vcosq.f32.pop %v1852
    %v1855 = vsinq.f32.pop %v1852
    %vm1856 = vweird.f32 %v409
    %v1857 = vadd.s32 %v1853, 3
    %v1858 = vand.u32 %v1857, 3
    %vm1859 = vcmp.lt.s32.totalorder %v1858, 2
    %vm1860 = vcmp.eq.s32.totalorder %v1858, 0
    %v1861 = vxor.u32 %v1855, 2147483648
    %v1862 = vsel %vm1860, %v1854, %v1861
    %vm1863 = vcmp.eq.s32.totalorder %v1858, 2
    %v1864 = vxor.u32 %v1854, 2147483648
    %v1865 = vsel %vm1863, %v1864, %v1855
    %v1866 = vsel %vm1859, %v1862, %v1865
    %v1867 = vsel %vm1856, nan, %v1866
    %v1868 = vand.u32 2147483647, %v410
    %vm1869 = vcmp.le.f32.partialorder %v1868, 0.7853982
    %vm1870 = vcmp.lt.s32.totalorder %v410, 0
    %v1871 = vand.u32 %v410, 2139095040
    %v1872 = vshrl.u32 %v1871, 23
    %v1873 = vsub.s32 %v1872, 127
    %v1874 = vand.u32 2147483647, %v410
    %v1875 = vand.u32 %v1874, 8388607
    %v1876 = vor.u32 %v1875, 8388608
    %v1877 = vsub.s32 0, %v1876
    %v1878 = vadd.s32 %v1873, 1
    %vm1879 = vcmp.gt.s32.totalorder %v1878, 0
    %v1880 = vsel %vm1879, %v1878, 0
    %v1881 = vshrl.u32 %v1880, 5
    %v1882 = vand.u32 %v1880, 31
    %v1883 = vsub.s32 32, %v1882
    %v1884 = vshrl.u32 683565275, %v1883
    %v1885 = vshll.u32 683565275, %v1882
    %v1886 = vshrl.u32 2475754826, %v1883
    %v1887 = vor.u32 %v1885, %v1886
    %v1888 = vshll.u32 2475754826, %v1882
    %v1889 = vshrl.u32 2131351028, %v1883
    %v1890 = vor.u32 %v1888, %v1889
    %v1891 = vshll.u32 2131351028, %v1882
    %v1892 = vshrl.u32 2102212464, %v1883
    %v1893 = vor.u32 %v1891, %v1892
    %v1894 = vshll.u32 2102212464, %v1882
    %v1895 = vshrl.u32 920167782, %v1883
    %v1896 = vor.u32 %v1894, %v1895
    %v1897 = vshll.u32 920167782, %v1882
    %v1898 = vshrl.u32 1326507024, %v1883
    %v1899 = vor.u32 %v1897, %v1898
    %vm1900 = vcmp.lt.s32.totalorder %v1881, 1
    %vm1901 = vcmp.lt.s32.totalorder %v1881, 2
    %vm1902 = vcmp.lt.s32.totalorder %v1881, 3
    %vm1903 = vcmp.lt.s32.totalorder %v1881, 4
    %v1904 = vsel %vm1900, %v1884, %v1887
    %v1905 = vsel %vm1903, %v1893, 2102212464
    %v1906 = vsel %vm1902, %v1890, %v1905
    %v1907 = vsel %vm1901, %v1904, %v1906
    %v1908 = vsel %vm1900, %v1887, %v1890
    %v1909 = vsel %vm1903, %v1896, 920167782
    %v1910 = vsel %vm1902, %v1893, %v1909
    %v1911 = vsel %vm1901, %v1908, %v1910
    %v1912 = vsel %vm1900, %v1890, %v1893
    %v1913 = vsel %vm1903, %v1899, 1326507024
    %v1914 = vsel %vm1902, %v1896, %v1913
    %v1915 = vsel %vm1901, %v1912, %v1914
    %v1916 = vshll.u32 %v1876, 8
    %v1917 = vmul.u32.u64.compose %v1916, %v1915
    %v1918 = vextract.low.u32 %v1917
    %v1919 = vextract.high.u32 %v1917
    %v1920 = vmul.u32.u64.compose %v1916, %v1911
    %v1921 = vextract.low.u32 %v1920
    %v1922 = vextract.high.u32 %v1920
    %v1923 = vmul.u32 %v1916, %v1907
    %v1924 = vadd.s32 %v1919, %v1921
    %vm1925 = vc.u32 %v1919, %v1921
    %v1926 = vadd.s32 %v1922, 1
    %v1927 = vsel %vm1925, %v1926, %v1922
    %v1928 = vadd.s32 %v1923, %v1927
    %v1929 = vadd.s32 %v1928, 536870912
    %v1930 = vshrl.u32 %v1929, 30
    %v1931 = vshll.u32 %v1930, 30
    %v1932 = vsub.s32 %v1928, %v1931
    %vm1933 = vcmp.lt.s32.totalorder %v1932, 0
    %v1934 = vsub.s32 0, %v1932
    %v1935 = vsel %vm1933, %v1934, %v1932
    %v1936 = vclz %v1935
    %v1937 = vsub.s32 %v1936, 2
    %vm1938 = vcmp.gt.s32.totalorder 0, %v1937
    %v1939 = vsel %vm1938, 0, %v1937
    %v1940 = vsub.s32 32, %v1939
    %v1941 = vshll.u32 %v1932, %v1939
    %v1942 = vshrl.u32 %v1924, %v1940
    %v1943 = vor.u32 %v1941, %v1942
    %v1944 = vsub.s32 4294967266, %v1939
    %v1945 = vadd.s32 %v1944, 127
    %v1946 = vshll.u32 %v1945, 23
    %v1947 = vor.u32 4788187, %v1946
    %v1948 = vand.u32 2147483647, %v1947
    %v1950 = vcvt.s32.f32 %v1943
    %v1951 = vmul.f32 %v1950, %v1948
    %v1952 = vxor.u32 %v1951, 2147483648
    %v1953 = vsel %vm1870, %v1952, %v1951
    %v1954 = vsub.s32 4, %v1930
    %v1955 = vsel %vm1870, %v1954, %v1930
    %v1956 = vsel %vm1869, %v410, %v1953
    %v1957 = vsel %vm1869, 0, %v1955
    %v1958 = vcosq.f32.pop %v1956
    %v1959 = vsinq.f32.pop %v1956
    %vm1960 = vweird.f32 %v410
    %v1961 = vadd.s32 %v1957, 3
    %v1962 = vand.u32 %v1961, 3
    %vm1963 = vcmp.lt.s32.totalorder %v1962, 2
    %vm1964 = vcmp.eq.s32.totalorder %v1962, 0
    %v1965 = vxor.u32 %v1959, 2147483648
    %v1966 = vsel %vm1964, %v1958, %v1965
    %vm1967 = vcmp.eq.s32.totalorder %v1962, 2
    %v1968 = vxor.u32 %v1958, 2147483648
    %v1969 = vsel %vm1967, %v1968, %v1959
    %v1970 = vsel %vm1963, %v1966, %v1969
    %v1971 = vsel %vm1960, nan, %v1970
    %v1972 = vand.u32 2147483647, %v411
    %vm1973 = vcmp.le.f32.partialorder %v1972, 0.7853982
    %vm1974 = vcmp.lt.s32.totalorder %v411, 0
    %v1975 = vand.u32 %v411, 2139095040
    %v1976 = vshrl.u32 %v1975, 23
    %v1977 = vsub.s32 %v1976, 127
    %v1978 = vand.u32 2147483647, %v411
    %v1979 = vand.u32 %v1978, 8388607
    %v1980 = vor.u32 %v1979, 8388608
    %v1981 = vsub.s32 0, %v1980
    %v1982 = vadd.s32 %v1977, 1
    %vm1983 = vcmp.gt.s32.totalorder %v1982, 0
    %v1984 = vsel %vm1983, %v1982, 0
    %v1985 = vshrl.u32 %v1984, 5
    %v1986 = vand.u32 %v1984, 31
    %v1987 = vsub.s32 32, %v1986
    %v1988 = vshrl.u32 683565275, %v1987
    %v1989 = vshll.u32 683565275, %v1986
    %v1990 = vshrl.u32 2475754826, %v1987
    %v1991 = vor.u32 %v1989, %v1990
    %v1992 = vshll.u32 2475754826, %v1986
    %v1993 = vshrl.u32 2131351028, %v1987
    %v1994 = vor.u32 %v1992, %v1993
    %v1995 = vshll.u32 2131351028, %v1986
    %v1996 = vshrl.u32 2102212464, %v1987
    %v1997 = vor.u32 %v1995, %v1996
    %v1998 = vshll.u32 2102212464, %v1986
    %v1999 = vshrl.u32 920167782, %v1987
    %v2000 = vor.u32 %v1998, %v1999
    %v2001 = vshll.u32 920167782, %v1986
    %v2002 = vshrl.u32 1326507024, %v1987
    %v2003 = vor.u32 %v2001, %v2002
    %vm2004 = vcmp.lt.s32.totalorder %v1985, 1
    %vm2005 = vcmp.lt.s32.totalorder %v1985, 2
    %vm2006 = vcmp.lt.s32.totalorder %v1985, 3
    %vm2007 = vcmp.lt.s32.totalorder %v1985, 4
    %v2008 = vsel %vm2004, %v1988, %v1991
    %v2009 = vsel %vm2007, %v1997, 2102212464
    %v2010 = vsel %vm2006, %v1994, %v2009
    %v2011 = vsel %vm2005, %v2008, %v2010
    %v2012 = vsel %vm2004, %v1991, %v1994
    %v2013 = vsel %vm2007, %v2000, 920167782
    %v2014 = vsel %vm2006, %v1997, %v2013
    %v2015 = vsel %vm2005, %v2012, %v2014
    %v2016 = vsel %vm2004, %v1994, %v1997
    %v2017 = vsel %vm2007, %v2003, 1326507024
    %v2018 = vsel %vm2006, %v2000, %v2017
    %v2019 = vsel %vm2005, %v2016, %v2018
    %v2020 = vshll.u32 %v1980, 8
    %v2021 = vmul.u32.u64.compose %v2020, %v2019
    %v2022 = vextract.low.u32 %v2021
    %v2023 = vextract.high.u32 %v2021
    %v2024 = vmul.u32.u64.compose %v2020, %v2015
    %v2025 = vextract.low.u32 %v2024
    %v2026 = vextract.high.u32 %v2024
    %v2027 = vmul.u32 %v2020, %v2011
    %v2028 = vadd.s32 %v2023, %v2025
    %vm2029 = vc.u32 %v2023, %v2025
    %v2030 = vadd.s32 %v2026, 1
    %v2031 = vsel %vm2029, %v2030, %v2026
    %v2032 = vadd.s32 %v2027, %v2031
    %v2033 = vadd.s32 %v2032, 536870912
    %v2034 = vshrl.u32 %v2033, 30
    %v2035 = vshll.u32 %v2034, 30
    %v2036 = vsub.s32 %v2032, %v2035
    %vm2037 = vcmp.lt.s32.totalorder %v2036, 0
    %v2038 = vsub.s32 0, %v2036
    %v2039 = vsel %vm2037, %v2038, %v2036
    %v2040 = vclz %v2039
    %v2041 = vsub.s32 %v2040, 2
    %vm2042 = vcmp.gt.s32.totalorder 0, %v2041
    %v2043 = vsel %vm2042, 0, %v2041
    %v2044 = vsub.s32 32, %v2043
    %v2045 = vshll.u32 %v2036, %v2043
    %v2046 = vshrl.u32 %v2028, %v2044
    %v2047 = vor.u32 %v2045, %v2046
    %v2048 = vsub.s32 4294967266, %v2043
    %v2049 = vadd.s32 %v2048, 127
    %v2050 = vshll.u32 %v2049, 23
    %v2051 = vor.u32 4788187, %v2050
    %v2052 = vand.u32 2147483647, %v2051
    %v2054 = vcvt.s32.f32 %v2047
    %v2055 = vmul.f32 %v2054, %v2052
    %v2056 = vxor.u32 %v2055, 2147483648
    %v2057 = vsel %vm1974, %v2056, %v2055
    %v2058 = vsub.s32 4, %v2034
    %v2059 = vsel %vm1974, %v2058, %v2034
    %v2060 = vsel %vm1973, %v411, %v2057
    %v2061 = vsel %vm1973, 0, %v2059
    %v2062 = vcosq.f32.pop %v2060
    %v2063 = vsinq.f32.pop %v2060
    %vm2064 = vweird.f32 %v411
    %v2065 = vadd.s32 %v2061, 3
    %v2066 = vand.u32 %v2065, 3
    %vm2067 = vcmp.lt.s32.totalorder %v2066, 2
    %vm2068 = vcmp.eq.s32.totalorder %v2066, 0
    %v2069 = vxor.u32 %v2063, 2147483648
    %v2070 = vsel %vm2068, %v2062, %v2069
    %vm2071 = vcmp.eq.s32.totalorder %v2066, 2
    %v2072 = vxor.u32 %v2062, 2147483648
    %v2073 = vsel %vm2071, %v2072, %v2063
    %v2074 = vsel %vm2067, %v2070, %v2073
    %v2075 = vsel %vm2064, nan, %v2074
    %v2076 = vmul.f32 %v396, %v1347
    %v2077 = vmul.f32 %v397, %v1451
    %v2078 = vmul.f32 %v398, %v1555
    %v2079 = vmul.f32 %v399, %v1659
    %v2080 = vmul.f32 %v400, %v1763
    %v2081 = vmul.f32 %v401, %v1867
    %v2082 = vmul.f32 %v402, %v1971
    %v2083 = vmul.f32 %v403, %v2075
    %v2084 = vld [vmem:[#allocation4] ss:$2 sm:$0xff]
    %s2085 = scalar_lea.vmem [#allocation4], 1
    %v2086 = vld [vmem:[%s2085] ss:$2 sm:$0xff]
    %v2095 = vcombine.low %v1236, %v1237
    %v2096 = vcombine.low %v1238, %v1239
    %v2097 = vcombine.low %v1240, %v1241
    %v2098 = vcombine.low %v1242, %v1243
    %v2100 = vunpack.c.l.s4 1966171168
    %v2101 = vunpack.c.0.s8 %v2100
    %v2102 = vlaneseq
    %v2103 = vshrl.u32 %v2102, 7
    %v2104 = vsub.s32 %v2101, %v2103
    %v2105 = vrot.slane %v2095, %v2104
    %v2107 = vunpack.c.l.s4 1966171168
    %v2108 = vunpack.c.0.s8 %v2107
    %v2109 = vlaneseq
    %v2110 = vshrl.u32 %v2109, 7
    %v2111 = vsub.s32 %v2108, %v2110
    %v2112 = vrot.slane %v2096, %v2111
    %v2114 = vunpack.c.l.s4 1966171168
    %v2115 = vunpack.c.0.s8 %v2114
    %v2116 = vlaneseq
    %v2117 = vshrl.u32 %v2116, 7
    %v2118 = vsub.s32 %v2115, %v2117
    %v2119 = vrot.slane %v2097, %v2118
    %v2121 = vunpack.c.l.s4 1966171168
    %v2122 = vunpack.c.0.s8 %v2121
    %v2123 = vlaneseq
    %v2124 = vshrl.u32 %v2123, 7
    %v2125 = vsub.s32 %v2122, %v2124
    %v2126 = vrot.slane %v2098, %v2125
    %v2127 = vcombine.low %v2105, %v2112
    %v2128 = vcombine.low %v2119, %v2126
    %v2130 = vunpack.c.l.s4 1966171168
    %v2131 = vunpack.c.0.s8 %v2130
    %v2132 = vlaneseq
    %v2133 = vshrl.u32 %v2132, 7
    %v2134 = vsub.s32 %v2131, %v2133
    %v2135 = vrot.slane %v2127, %v2134
    %v2137 = vunpack.c.l.s4 1966171168
    %v2138 = vunpack.c.0.s8 %v2137
    %v2139 = vlaneseq
    %v2140 = vshrl.u32 %v2139, 7
    %v2141 = vsub.s32 %v2138, %v2140
    %v2142 = vrot.slane %v2128, %v2141
    %v2143 = vcombine.low %v2135, %v2142
    %v2145 = vadd.f32 %v2084, %v2143
    %2146 = vst [vmem:[#allocation7] ss:$2 sm:$0xff] %v2145
    %v2155 = vcombine.low %v2076, %v2077
    %v2156 = vcombine.low %v2078, %v2079
    %v2157 = vcombine.low %v2080, %v2081
    %v2158 = vcombine.low %v2082, %v2083
    %v2160 = vunpack.c.l.s4 1966171168
    %v2161 = vunpack.c.0.s8 %v2160
    %v2162 = vlaneseq
    %v2163 = vshrl.u32 %v2162, 7
    %v2164 = vsub.s32 %v2161, %v2163
    %v2165 = vrot.slane %v2155, %v2164
    %v2167 = vunpack.c.l.s4 1966171168
    %v2168 = vunpack.c.0.s8 %v2167
    %v2169 = vlaneseq
    %v2170 = vshrl.u32 %v2169, 7
    %v2171 = vsub.s32 %v2168, %v2170
    %v2172 = vrot.slane %v2156, %v2171
    %v2174 = vunpack.c.l.s4 1966171168
    %v2175 = vunpack.c.0.s8 %v2174
    %v2176 = vlaneseq
    %v2177 = vshrl.u32 %v2176, 7
    %v2178 = vsub.s32 %v2175, %v2177
    %v2179 = vrot.slane %v2157, %v2178
    %v2181 = vunpack.c.l.s4 1966171168
    %v2182 = vunpack.c.0.s8 %v2181
    %v2183 = vlaneseq
    %v2184 = vshrl.u32 %v2183, 7
    %v2185 = vsub.s32 %v2182, %v2184
    %v2186 = vrot.slane %v2158, %v2185
    %v2187 = vcombine.low %v2165, %v2172
    %v2188 = vcombine.low %v2179, %v2186
    %v2190 = vunpack.c.l.s4 1966171168
    %v2191 = vunpack.c.0.s8 %v2190
    %v2192 = vlaneseq
    %v2193 = vshrl.u32 %v2192, 7
    %v2194 = vsub.s32 %v2191, %v2193
    %v2195 = vrot.slane %v2187, %v2194
    %v2197 = vunpack.c.l.s4 1966171168
    %v2198 = vunpack.c.0.s8 %v2197
    %v2199 = vlaneseq
    %v2200 = vshrl.u32 %v2199, 7
    %v2201 = vsub.s32 %v2198, %v2200
    %v2202 = vrot.slane %v2188, %v2201
    %v2203 = vcombine.low %v2195, %v2202
    %v2205 = vadd.f32 %v2086, %v2203
    %s2206 = scalar_lea.vmem [#allocation7], 1
    %2207 = vst [vmem:[%s2206] ss:$2 sm:$0xff] %v2205
    // Predicated region
    $region10: #{tpu_custom_call.1} parent=1 // pred_check
      _
    $region11: #{tpu_custom_call.1} parent=1 // pred_check_branch
      %2209 = sbr.rel (0) target = $region13
    $region12: #{tpu_custom_call.1} parent=1 // pred_region
      %s2211 = ssub.s32 256, 256
      %2212 = vsyncadd [#allocation6], %s2211
      %s2214 = sshll.u32 [#allocation7], 4
      %s2215 = int_to_ptr.vmem [resolvable:$true] %s2214
      %2217 = dma.vmem_to_hbm [thread:$0]  %s2215, 256, %s2, [#allocation6]
    $region13: #{tpu_custom_call.1} parent=1 // pred_fallthru
      _
    // Predicated region
    $region14: #{tpu_custom_call.1} parent=1 // pred_check
      _
    $region15: #{tpu_custom_call.1} parent=1 // pred_check_branch
      %2219 = sbr.rel (0) target = $region17
    $region16: #{tpu_custom_call.1} parent=1 // pred_region
      %2220 = dma.done [#allocation6], 256
    $region17: #{tpu_custom_call.1} parent=1 // pred_fallthru
      _
    %2221 = vsyncpa [#allocation5], 1
    %2222 = vsyncpa [#allocation6], 1

</llo_original>
